<compile_context>
chip_gen: v7x
topology: tpu7x:2x2x1
jax: 0.10.0
libtpu: 0.0.40
codegen_flags: <defaults>
</compile_context>

<pallas_src>
import functools

import jax
import jax.numpy as jnp
from jax.experimental import pallas as pl
from jax.experimental.pallas import tpu as pltpu

H = 64      # hidden_size  (fixed in the module)
C = 41      # num_classes  (fixed in the module)
HP = 128    # per-gate lane padding (one vreg-wide lane block per gate)


def _gru_bwd_fc_logsoftmax_kernel(x_ref, h0_ref, wi_ref, wh_ref, bi_ref, bh_ref,
                                  wfc_ref, bfc_ref, out_ref, *, T, B):
    # x_ref: (T*B, D) time-major flattened, h0_ref: (B, HP), wi_ref: (D, 3*HP),
    # wh_ref: (HP, 3*HP), bi/bh_ref: (1, 3*HP), wfc_ref: (HP, C), bfc_ref: (1, C),
    # out_ref: (B, C).  Gate layout: [r | z | n] at lane offsets 0 / HP / 2*HP.

    # Hoisted input projection: one matmul covering all T timesteps.
    gi_all = (jnp.dot(x_ref[...], wi_ref[...],
                      preferred_element_type=jnp.float32)
              + bi_ref[...])                                    # (T*B, 3*HP)

    # Hoisted loop invariants (W_hh load + b_hh broadcast happen exactly once).
    wh = wh_ref[...]                                            # (HP, 3*HP)
    bh = jnp.broadcast_to(bh_ref[...], (B, 3 * HP))             # (B, 3*HP)

    h = h0_ref[...]                                             # (B, HP)
    # Fully unrolled reverse-time recurrence (backward GRU direction).
    for s in range(T):
        t = T - 1 - s
        gi = gi_all[t * B:(t + 1) * B, :]                       # static slice, (B, 3*HP)
        gh = jnp.dot(h, wh, preferred_element_type=jnp.float32) + bh
        # PyTorch GRU gate order: [r, z, n]; each gate is a full 128-lane block.
        i_r, i_z, i_n = gi[:, 0:HP], gi[:, HP:2 * HP], gi[:, 2 * HP:3 * HP]
        h_r, h_z, h_n = gh[:, 0:HP], gh[:, HP:2 * HP], gh[:, 2 * HP:3 * HP]
        r = jax.nn.sigmoid(i_r + h_r)
        z = jax.nn.sigmoid(i_z + h_z)
        n = jnp.tanh(i_n + r * h_n)
        h = (1.0 - z) * n + z * h                               # pad lanes remain 0

    # fc + log_softmax (dim=1); W_fc pad rows are zero so pad lanes contribute 0.
    logit = (jnp.dot(h, wfc_ref[...], preferred_element_type=jnp.float32)
             + bfc_ref[...])                                    # (B, C)
    m = jnp.max(logit, axis=-1, keepdims=True)
    shifted = logit - m
    lse = jnp.log(jnp.sum(jnp.exp(shifted), axis=-1, keepdims=True))
    out_ref[...] = shifted - lse


def _pad_gate_cols(w):
    """(..., 3H) -> (..., 3*HP): each gate zero-padded to a full 128-lane block."""
    parts = []
    for g in range(3):
        p = w[..., g * H:(g + 1) * H]
        pad = [(0, 0)] * (p.ndim - 1) + [(0, HP - H)]
        parts.append(jnp.pad(p, pad))
    return jnp.concatenate(parts, axis=-1)


def rnn_forward(input_x, hidden, params):
    """input_x: (B, T) int32 token ids; hidden: (2, B, H) float32 initial state."""
    emb_table = params["embed"]                                 # (n, d)
    B, T = input_x.shape
    D = emb_table.shape[1]

    # Embedding gather (glue) + time-major flatten: row t*B + b <-> (timestep t, batch b).
    x = jnp.take(emb_table, input_x, axis=0)                    # (B, T, D)
    x_tm = jnp.transpose(x, (1, 0, 2)).reshape(T * B, D).astype(jnp.float32)

    f32 = jnp.float32
    # Backward-direction GRU parameters, transposed to (in, out) and gate-padded
    # to 128-lane blocks.  Pad cols/rows are zero (so padded h lanes stay 0 for
    # all steps and cannot feed back into real lanes or the FC output).
    wi = _pad_gate_cols(params["w_ih_rev"].T.astype(f32))                   # (D, 3*HP)
    wh = _pad_gate_cols(params["w_hh_rev"].T.astype(f32))                   # (H, 3*HP)
    wh = jnp.pad(wh, ((0, HP - H), (0, 0)))                                 # (HP, 3*HP)
    bi = _pad_gate_cols(params["b_ih_rev"].reshape(1, 3 * H).astype(f32))   # (1, 3*HP)
    bh = _pad_gate_cols(params["b_hh_rev"].reshape(1, 3 * H).astype(f32))   # (1, 3*HP)
    wfc = jnp.pad(params["w_fc"].T.astype(f32), ((0, HP - H), (0, 0)))      # (HP, C)
    bfc = params["b_fc"].reshape(1, C).astype(f32)                          # (1, C)
    h0 = jnp.pad(hidden[1].astype(f32), ((0, 0), (0, HP - H)))              # (B, HP)

    def full_spec(shape):
        return pl.BlockSpec(shape, lambda i: (0,) * len(shape))

    kernel = functools.partial(_gru_bwd_fc_logsoftmax_kernel, T=T, B=B)

    # TODO(synk): at realistic batch sizes add a "parallel" batch grid axis (uses
    # v7x's second TensorCore) and feed bf16 matmul operands on v6e/v7x; at the
    # toy shapes here both are neutral, so the single-block f32 layout is kept.
    out = pl.pallas_call(
        kernel,
        out_shape=jax.ShapeDtypeStruct((B, C), jnp.float32),
        grid=(1,),
        in_specs=[
            full_spec((T * B, D)),       # x, time-major flattened
            full_spec((B, HP)),          # h0 (backward-direction init state)
            full_spec((D, 3 * HP)),      # W_ih^T, gate-padded
            full_spec((HP, 3 * HP)),     # W_hh^T, gate- and row-padded
            full_spec((1, 3 * HP)),      # b_ih, gate-padded
            full_spec((1, 3 * HP)),      # b_hh, gate-padded
            full_spec((HP, C)),          # W_fc^T, row-padded
            full_spec((1, C)),           # b_fc
        ],
        out_specs=full_spec((B, C)),
        compiler_params=pltpu.CompilerParams(
            dimension_semantics=("arbitrary",)),
    )(x_tm, h0, wi, wh, bi, bh, wfc, bfc)
    return out


def init_params(key, n_vocab, d):
    ks = jax.random.split(key, 8)
    s = 1.0 / jnp.sqrt(jnp.float32(H))
    u = lambda k, shape: jax.random.uniform(k, shape, jnp.float32, -s, s)
    return {
        "embed":    jax.random.normal(ks[0], (n_vocab, d), jnp.float32) * 0.1,
        "w_ih_rev": u(ks[1], (3 * H, d)),
        "w_hh_rev": u(ks[2], (3 * H, H)),
        "b_ih_rev": u(ks[3], (3 * H,)),
        "b_hh_rev": u(ks[4], (3 * H,)),
        "w_fc":     u(ks[5], (C, H)),
        "b_fc":     u(ks[6], (C,)),
    }


def _reference(input_x, hidden, params):
    """Pure-JAX reference of the same forward (backward GRU dir + fc + log_softmax)."""
    x = jnp.take(params["embed"], input_x, axis=0).astype(jnp.float32)   # (B, T, D)
    wi = params["w_ih_rev"].astype(jnp.float32)                          # (3H, D)
    wh = params["w_hh_rev"].astype(jnp.float32)                          # (3H, H)
    bi = params["b_ih_rev"].astype(jnp.float32)
    bh = params["b_hh_rev"].astype(jnp.float32)
    h = hidden[1].astype(jnp.float32)                                    # (B, H)
    T = x.shape[1]
    for t in range(T - 1, -1, -1):
        gi = x[:, t, :] @ wi.T + bi
        gh = h @ wh.T + bh
        i_r, i_z, i_n = gi[:, :H], gi[:, H:2 * H], gi[:, 2 * H:]
        h_r, h_z, h_n = gh[:, :H], gh[:, H:2 * H], gh[:, 2 * H:]
        r = jax.nn.sigmoid(i_r + h_r)
        z = jax.nn.sigmoid(i_z + h_z)
        n = jnp.tanh(i_n + r * h_n)
        h = (1.0 - z) * n + z * h
    logit = h @ params["w_fc"].T.astype(jnp.float32) + params["b_fc"].astype(jnp.float32)
    return jax.nn.log_softmax(logit, axis=1)


if __name__ == "__main__":
    B, T, D, N_VOCAB = 2, 8, 32, 50   # small shapes: batch=2, seq=8, embed_dim=32

    key = jax.random.PRNGKey(0)
    k_params, k_idx, k_h = jax.random.split(key, 3)
    params = init_params(k_params, N_VOCAB, D)

    input_x = jax.random.randint(k_idx, (B, T), 0, N_VOCAB, dtype=jnp.int32)
    hidden = 0.1 * jax.random.normal(k_h, (2, B, H), jnp.float32)   # (num_layers*2, B, H)

    out = rnn_forward(input_x, hidden, params)
    out = jax.block_until_ready(out)

    assert out.shape == (B, C)
    # log_softmax rows must sum to ~1 in prob space
    assert jnp.allclose(jnp.sum(jnp.exp(out), axis=1), 1.0, atol=1e-4)
    # match the pure-JAX reference
    ref = _reference(input_x, hidden, params)
    assert jnp.allclose(out, ref, atol=2e-3, rtol=2e-3), float(jnp.max(jnp.abs(out - ref)))
    print("KERNEL_OK")
</pallas_src>

<mosaic_0001>
module attributes {stable_mosaic.version = 11 : i64} {
  func.func @_gru_bwd_fc_logsoftmax_kernel(%arg0: i32, %arg1: memref<16x32xf32, #tpu.memory_space<vmem>>, %arg2: memref<2x128xf32, #tpu.memory_space<vmem>>, %arg3: memref<32x384xf32, #tpu.memory_space<vmem>>, %arg4: memref<128x384xf32, #tpu.memory_space<vmem>>, %arg5: memref<1x384xf32, #tpu.memory_space<vmem>>, %arg6: memref<1x384xf32, #tpu.memory_space<vmem>>, %arg7: memref<128x41xf32, #tpu.memory_space<vmem>>, %arg8: memref<1x41xf32, #tpu.memory_space<vmem>>, %arg9: memref<2x41xf32, #tpu.memory_space<vmem>>) attributes {dimension_semantics = [#tpu.dimension_semantics<arbitrary>], iteration_bounds = array<i64: 1>, scalar_prefetch = 0 : i64, scratch_operands = 0 : i64, tpu.core_type = #tpu.core_type<tc>, window_params = [{pipeline_mode = #tpu.pipeline_mode<synchronous>, transform_indices = @transform_0, window_bounds = array<i64: 16, 32>}, {pipeline_mode = #tpu.pipeline_mode<synchronous>, transform_indices = @transform_1, window_bounds = array<i64: 2, 128>}, {pipeline_mode = #tpu.pipeline_mode<synchronous>, transform_indices = @transform_2, window_bounds = array<i64: 32, 384>}, {pipeline_mode = #tpu.pipeline_mode<synchronous>, transform_indices = @transform_3, window_bounds = array<i64: 128, 384>}, {pipeline_mode = #tpu.pipeline_mode<synchronous>, transform_indices = @transform_4, window_bounds = array<i64: 1, 384>}, {pipeline_mode = #tpu.pipeline_mode<synchronous>, transform_indices = @transform_5, window_bounds = array<i64: 1, 384>}, {pipeline_mode = #tpu.pipeline_mode<synchronous>, transform_indices = @transform_6, window_bounds = array<i64: 128, 41>}, {pipeline_mode = #tpu.pipeline_mode<synchronous>, transform_indices = @transform_7, window_bounds = array<i64: 1, 41>}, {pipeline_mode = #tpu.pipeline_mode<synchronous>, transform_indices = @transform_8, window_bounds = array<i64: 2, 41>}]} {
    %c0 = arith.constant 0 : index
    %c0_0 = arith.constant 0 : index
    %0 = vector.load %arg1[%c0, %c0_0] : memref<16x32xf32, #tpu.memory_space<vmem>>, vector<16x32xf32>
    %c0_1 = arith.constant 0 : index
    %c0_2 = arith.constant 0 : index
    %1 = vector.load %arg3[%c0_1, %c0_2] : memref<32x384xf32, #tpu.memory_space<vmem>>, vector<32x384xf32>
    %cst = arith.constant dense<0.000000e+00> : vector<16x384xf32>
    %2 = tpu.matmul %0, %1, %cst {dimension_numbers = #tpu.dot_dimension_numbers<[1], [0], [0], [1], [0, 0, 1, 1], [], []>} : vector<16x32xf32>, vector<32x384xf32>, vector<16x384xf32> -> vector<16x384xf32>
    %c0_3 = arith.constant 0 : index
    %c0_4 = arith.constant 0 : index
    %3 = vector.load %arg5[%c0_3, %c0_4] : memref<1x384xf32, #tpu.memory_space<vmem>>, vector<1x384xf32>
    %4 = vector.broadcast %3 : vector<1x384xf32> to vector<16x384xf32>
    %5 = arith.addf %2, %4 : vector<16x384xf32>
    %c0_5 = arith.constant 0 : index
    %c0_6 = arith.constant 0 : index
    %6 = vector.load %arg4[%c0_5, %c0_6] : memref<128x384xf32, #tpu.memory_space<vmem>>, vector<128x384xf32>
    %c0_7 = arith.constant 0 : index
    %c0_8 = arith.constant 0 : index
    %7 = vector.load %arg6[%c0_7, %c0_8] : memref<1x384xf32, #tpu.memory_space<vmem>>, vector<1x384xf32>
    %8 = vector.shape_cast %7 : vector<1x384xf32> to vector<1x384xf32>
    %9 = vector.broadcast %8 : vector<1x384xf32> to vector<2x384xf32>
    %c0_9 = arith.constant 0 : index
    %c0_10 = arith.constant 0 : index
    %10 = vector.load %arg2[%c0_9, %c0_10] : memref<2x128xf32, #tpu.memory_space<vmem>>, vector<2x128xf32>
    %11 = vector.extract_strided_slice %5 {offsets = [14, 0], sizes = [2, 384], strides = [1, 1]} : vector<16x384xf32> to vector<2x384xf32>
    %cst_11 = arith.constant dense<0.000000e+00> : vector<2x384xf32>
    %12 = tpu.matmul %10, %6, %cst_11 {dimension_numbers = #tpu.dot_dimension_numbers<[1], [0], [0], [1], [0, 0, 1, 1], [], []>} : vector<2x128xf32>, vector<128x384xf32>, vector<2x384xf32> -> vector<2x384xf32>
    %13 = arith.addf %12, %9 : vector<2x384xf32>
    %14 = vector.extract_strided_slice %11 {offsets = [0, 0], sizes = [2, 128], strides = [1, 1]} : vector<2x384xf32> to vector<2x128xf32>
    %15 = vector.extract_strided_slice %11 {offsets = [0, 128], sizes = [2, 128], strides = [1, 1]} : vector<2x384xf32> to vector<2x128xf32>
    %16 = vector.extract_strided_slice %11 {offsets = [0, 256], sizes = [2, 128], strides = [1, 1]} : vector<2x384xf32> to vector<2x128xf32>
    %17 = vector.extract_strided_slice %13 {offsets = [0, 0], sizes = [2, 128], strides = [1, 1]} : vector<2x384xf32> to vector<2x128xf32>
    %18 = vector.extract_strided_slice %13 {offsets = [0, 128], sizes = [2, 128], strides = [1, 1]} : vector<2x384xf32> to vector<2x128xf32>
    %19 = vector.extract_strided_slice %13 {offsets = [0, 256], sizes = [2, 128], strides = [1, 1]} : vector<2x384xf32> to vector<2x128xf32>
    %20 = arith.addf %14, %17 : vector<2x128xf32>
    %21 = arith.negf %20 : vector<2x128xf32>
    %22 = math.exp %21 : vector<2x128xf32>
    %cst_12 = arith.constant 1.000000e+00 : f32
    %23 = vector.broadcast %cst_12 : f32 to vector<2x128xf32>
    %24 = arith.addf %23, %22 : vector<2x128xf32>
    %25 = arith.divf %23, %24 : vector<2x128xf32>
    %26 = arith.addf %15, %18 : vector<2x128xf32>
    %27 = arith.negf %26 : vector<2x128xf32>
    %28 = math.exp %27 : vector<2x128xf32>
    %cst_13 = arith.constant 1.000000e+00 : f32
    %29 = vector.broadcast %cst_13 : f32 to vector<2x128xf32>
    %30 = arith.addf %29, %28 : vector<2x128xf32>
    %31 = arith.divf %29, %30 : vector<2x128xf32>
    %32 = arith.mulf %25, %19 : vector<2x128xf32>
    %33 = arith.addf %16, %32 : vector<2x128xf32>
    %34 = math.tanh %33 : vector<2x128xf32>
    %cst_14 = arith.constant 1.000000e+00 : f32
    %35 = vector.broadcast %cst_14 : f32 to vector<2x128xf32>
    %36 = arith.subf %35, %31 : vector<2x128xf32>
    %37 = arith.mulf %36, %34 : vector<2x128xf32>
    %38 = arith.mulf %31, %10 : vector<2x128xf32>
    %39 = arith.addf %37, %38 : vector<2x128xf32>
    %40 = vector.extract_strided_slice %5 {offsets = [12, 0], sizes = [2, 384], strides = [1, 1]} : vector<16x384xf32> to vector<2x384xf32>
    %cst_15 = arith.constant dense<0.000000e+00> : vector<2x384xf32>
    %41 = tpu.matmul %39, %6, %cst_15 {dimension_numbers = #tpu.dot_dimension_numbers<[1], [0], [0], [1], [0, 0, 1, 1], [], []>} : vector<2x128xf32>, vector<128x384xf32>, vector<2x384xf32> -> vector<2x384xf32>
    %42 = arith.addf %41, %9 : vector<2x384xf32>
    %43 = vector.extract_strided_slice %40 {offsets = [0, 0], sizes = [2, 128], strides = [1, 1]} : vector<2x384xf32> to vector<2x128xf32>
    %44 = vector.extract_strided_slice %40 {offsets = [0, 128], sizes = [2, 128], strides = [1, 1]} : vector<2x384xf32> to vector<2x128xf32>
    %45 = vector.extract_strided_slice %40 {offsets = [0, 256], sizes = [2, 128], strides = [1, 1]} : vector<2x384xf32> to vector<2x128xf32>
    %46 = vector.extract_strided_slice %42 {offsets = [0, 0], sizes = [2, 128], strides = [1, 1]} : vector<2x384xf32> to vector<2x128xf32>
    %47 = vector.extract_strided_slice %42 {offsets = [0, 128], sizes = [2, 128], strides = [1, 1]} : vector<2x384xf32> to vector<2x128xf32>
    %48 = vector.extract_strided_slice %42 {offsets = [0, 256], sizes = [2, 128], strides = [1, 1]} : vector<2x384xf32> to vector<2x128xf32>
    %49 = arith.addf %43, %46 : vector<2x128xf32>
    %50 = arith.negf %49 : vector<2x128xf32>
    %51 = math.exp %50 : vector<2x128xf32>
    %cst_16 = arith.constant 1.000000e+00 : f32
    %52 = vector.broadcast %cst_16 : f32 to vector<2x128xf32>
    %53 = arith.addf %52, %51 : vector<2x128xf32>
    %54 = arith.divf %52, %53 : vector<2x128xf32>
    %55 = arith.addf %44, %47 : vector<2x128xf32>
    %56 = arith.negf %55 : vector<2x128xf32>
    %57 = math.exp %56 : vector<2x128xf32>
    %cst_17 = arith.constant 1.000000e+00 : f32
    %58 = vector.broadcast %cst_17 : f32 to vector<2x128xf32>
    %59 = arith.addf %58, %57 : vector<2x128xf32>
    %60 = arith.divf %58, %59 : vector<2x128xf32>
    %61 = arith.mulf %54, %48 : vector<2x128xf32>
    %62 = arith.addf %45, %61 : vector<2x128xf32>
    %63 = math.tanh %62 : vector<2x128xf32>
    %cst_18 = arith.constant 1.000000e+00 : f32
    %64 = vector.broadcast %cst_18 : f32 to vector<2x128xf32>
    %65 = arith.subf %64, %60 : vector<2x128xf32>
    %66 = arith.mulf %65, %63 : vector<2x128xf32>
    %67 = arith.mulf %60, %39 : vector<2x128xf32>
    %68 = arith.addf %66, %67 : vector<2x128xf32>
    %69 = vector.extract_strided_slice %5 {offsets = [10, 0], sizes = [2, 384], strides = [1, 1]} : vector<16x384xf32> to vector<2x384xf32>
    %cst_19 = arith.constant dense<0.000000e+00> : vector<2x384xf32>
    %70 = tpu.matmul %68, %6, %cst_19 {dimension_numbers = #tpu.dot_dimension_numbers<[1], [0], [0], [1], [0, 0, 1, 1], [], []>} : vector<2x128xf32>, vector<128x384xf32>, vector<2x384xf32> -> vector<2x384xf32>
    %71 = arith.addf %70, %9 : vector<2x384xf32>
    %72 = vector.extract_strided_slice %69 {offsets = [0, 0], sizes = [2, 128], strides = [1, 1]} : vector<2x384xf32> to vector<2x128xf32>
    %73 = vector.extract_strided_slice %69 {offsets = [0, 128], sizes = [2, 128], strides = [1, 1]} : vector<2x384xf32> to vector<2x128xf32>
    %74 = vector.extract_strided_slice %69 {offsets = [0, 256], sizes = [2, 128], strides = [1, 1]} : vector<2x384xf32> to vector<2x128xf32>
    %75 = vector.extract_strided_slice %71 {offsets = [0, 0], sizes = [2, 128], strides = [1, 1]} : vector<2x384xf32> to vector<2x128xf32>
    %76 = vector.extract_strided_slice %71 {offsets = [0, 128], sizes = [2, 128], strides = [1, 1]} : vector<2x384xf32> to vector<2x128xf32>
    %77 = vector.extract_strided_slice %71 {offsets = [0, 256], sizes = [2, 128], strides = [1, 1]} : vector<2x384xf32> to vector<2x128xf32>
    %78 = arith.addf %72, %75 : vector<2x128xf32>
    %79 = arith.negf %78 : vector<2x128xf32>
    %80 = math.exp %79 : vector<2x128xf32>
    %cst_20 = arith.constant 1.000000e+00 : f32
    %81 = vector.broadcast %cst_20 : f32 to vector<2x128xf32>
    %82 = arith.addf %81, %80 : vector<2x128xf32>
    %83 = arith.divf %81, %82 : vector<2x128xf32>
    %84 = arith.addf %73, %76 : vector<2x128xf32>
    %85 = arith.negf %84 : vector<2x128xf32>
    %86 = math.exp %85 : vector<2x128xf32>
    %cst_21 = arith.constant 1.000000e+00 : f32
    %87 = vector.broadcast %cst_21 : f32 to vector<2x128xf32>
    %88 = arith.addf %87, %86 : vector<2x128xf32>
    %89 = arith.divf %87, %88 : vector<2x128xf32>
    %90 = arith.mulf %83, %77 : vector<2x128xf32>
    %91 = arith.addf %74, %90 : vector<2x128xf32>
    %92 = math.tanh %91 : vector<2x128xf32>
    %cst_22 = arith.constant 1.000000e+00 : f32
    %93 = vector.broadcast %cst_22 : f32 to vector<2x128xf32>
    %94 = arith.subf %93, %89 : vector<2x128xf32>
    %95 = arith.mulf %94, %92 : vector<2x128xf32>
    %96 = arith.mulf %89, %68 : vector<2x128xf32>
    %97 = arith.addf %95, %96 : vector<2x128xf32>
    %98 = vector.extract_strided_slice %5 {offsets = [8, 0], sizes = [2, 384], strides = [1, 1]} : vector<16x384xf32> to vector<2x384xf32>
    %cst_23 = arith.constant dense<0.000000e+00> : vector<2x384xf32>
    %99 = tpu.matmul %97, %6, %cst_23 {dimension_numbers = #tpu.dot_dimension_numbers<[1], [0], [0], [1], [0, 0, 1, 1], [], []>} : vector<2x128xf32>, vector<128x384xf32>, vector<2x384xf32> -> vector<2x384xf32>
    %100 = arith.addf %99, %9 : vector<2x384xf32>
    %101 = vector.extract_strided_slice %98 {offsets = [0, 0], sizes = [2, 128], strides = [1, 1]} : vector<2x384xf32> to vector<2x128xf32>
    %102 = vector.extract_strided_slice %98 {offsets = [0, 128], sizes = [2, 128], strides = [1, 1]} : vector<2x384xf32> to vector<2x128xf32>
    %103 = vector.extract_strided_slice %98 {offsets = [0, 256], sizes = [2, 128], strides = [1, 1]} : vector<2x384xf32> to vector<2x128xf32>
    %104 = vector.extract_strided_slice %100 {offsets = [0, 0], sizes = [2, 128], strides = [1, 1]} : vector<2x384xf32> to vector<2x128xf32>
    %105 = vector.extract_strided_slice %100 {offsets = [0, 128], sizes = [2, 128], strides = [1, 1]} : vector<2x384xf32> to vector<2x128xf32>
    %106 = vector.extract_strided_slice %100 {offsets = [0, 256], sizes = [2, 128], strides = [1, 1]} : vector<2x384xf32> to vector<2x128xf32>
    %107 = arith.addf %101, %104 : vector<2x128xf32>
    %108 = arith.negf %107 : vector<2x128xf32>
    %109 = math.exp %108 : vector<2x128xf32>
    %cst_24 = arith.constant 1.000000e+00 : f32
    %110 = vector.broadcast %cst_24 : f32 to vector<2x128xf32>
    %111 = arith.addf %110, %109 : vector<2x128xf32>
    %112 = arith.divf %110, %111 : vector<2x128xf32>
    %113 = arith.addf %102, %105 : vector<2x128xf32>
    %114 = arith.negf %113 : vector<2x128xf32>
    %115 = math.exp %114 : vector<2x128xf32>
    %cst_25 = arith.constant 1.000000e+00 : f32
    %116 = vector.broadcast %cst_25 : f32 to vector<2x128xf32>
    %117 = arith.addf %116, %115 : vector<2x128xf32>
    %118 = arith.divf %116, %117 : vector<2x128xf32>
    %119 = arith.mulf %112, %106 : vector<2x128xf32>
    %120 = arith.addf %103, %119 : vector<2x128xf32>
    %121 = math.tanh %120 : vector<2x128xf32>
    %cst_26 = arith.constant 1.000000e+00 : f32
    %122 = vector.broadcast %cst_26 : f32 to vector<2x128xf32>
    %123 = arith.subf %122, %118 : vector<2x128xf32>
    %124 = arith.mulf %123, %121 : vector<2x128xf32>
    %125 = arith.mulf %118, %97 : vector<2x128xf32>
    %126 = arith.addf %124, %125 : vector<2x128xf32>
    %127 = vector.extract_strided_slice %5 {offsets = [6, 0], sizes = [2, 384], strides = [1, 1]} : vector<16x384xf32> to vector<2x384xf32>
    %cst_27 = arith.constant dense<0.000000e+00> : vector<2x384xf32>
    %128 = tpu.matmul %126, %6, %cst_27 {dimension_numbers = #tpu.dot_dimension_numbers<[1], [0], [0], [1], [0, 0, 1, 1], [], []>} : vector<2x128xf32>, vector<128x384xf32>, vector<2x384xf32> -> vector<2x384xf32>
    %129 = arith.addf %128, %9 : vector<2x384xf32>
    %130 = vector.extract_strided_slice %127 {offsets = [0, 0], sizes = [2, 128], strides = [1, 1]} : vector<2x384xf32> to vector<2x128xf32>
    %131 = vector.extract_strided_slice %127 {offsets = [0, 128], sizes = [2, 128], strides = [1, 1]} : vector<2x384xf32> to vector<2x128xf32>
    %132 = vector.extract_strided_slice %127 {offsets = [0, 256], sizes = [2, 128], strides = [1, 1]} : vector<2x384xf32> to vector<2x128xf32>
    %133 = vector.extract_strided_slice %129 {offsets = [0, 0], sizes = [2, 128], strides = [1, 1]} : vector<2x384xf32> to vector<2x128xf32>
    %134 = vector.extract_strided_slice %129 {offsets = [0, 128], sizes = [2, 128], strides = [1, 1]} : vector<2x384xf32> to vector<2x128xf32>
    %135 = vector.extract_strided_slice %129 {offsets = [0, 256], sizes = [2, 128], strides = [1, 1]} : vector<2x384xf32> to vector<2x128xf32>
    %136 = arith.addf %130, %133 : vector<2x128xf32>
    %137 = arith.negf %136 : vector<2x128xf32>
    %138 = math.exp %137 : vector<2x128xf32>
    %cst_28 = arith.constant 1.000000e+00 : f32
    %139 = vector.broadcast %cst_28 : f32 to vector<2x128xf32>
    %140 = arith.addf %139, %138 : vector<2x128xf32>
    %141 = arith.divf %139, %140 : vector<2x128xf32>
    %142 = arith.addf %131, %134 : vector<2x128xf32>
    %143 = arith.negf %142 : vector<2x128xf32>
    %144 = math.exp %143 : vector<2x128xf32>
    %cst_29 = arith.constant 1.000000e+00 : f32
    %145 = vector.broadcast %cst_29 : f32 to vector<2x128xf32>
    %146 = arith.addf %145, %144 : vector<2x128xf32>
    %147 = arith.divf %145, %146 : vector<2x128xf32>
    %148 = arith.mulf %141, %135 : vector<2x128xf32>
    %149 = arith.addf %132, %148 : vector<2x128xf32>
    %150 = math.tanh %149 : vector<2x128xf32>
    %cst_30 = arith.constant 1.000000e+00 : f32
    %151 = vector.broadcast %cst_30 : f32 to vector<2x128xf32>
    %152 = arith.subf %151, %147 : vector<2x128xf32>
    %153 = arith.mulf %152, %150 : vector<2x128xf32>
    %154 = arith.mulf %147, %126 : vector<2x128xf32>
    %155 = arith.addf %153, %154 : vector<2x128xf32>
    %156 = vector.extract_strided_slice %5 {offsets = [4, 0], sizes = [2, 384], strides = [1, 1]} : vector<16x384xf32> to vector<2x384xf32>
    %cst_31 = arith.constant dense<0.000000e+00> : vector<2x384xf32>
    %157 = tpu.matmul %155, %6, %cst_31 {dimension_numbers = #tpu.dot_dimension_numbers<[1], [0], [0], [1], [0, 0, 1, 1], [], []>} : vector<2x128xf32>, vector<128x384xf32>, vector<2x384xf32> -> vector<2x384xf32>
    %158 = arith.addf %157, %9 : vector<2x384xf32>
    %159 = vector.extract_strided_slice %156 {offsets = [0, 0], sizes = [2, 128], strides = [1, 1]} : vector<2x384xf32> to vector<2x128xf32>
    %160 = vector.extract_strided_slice %156 {offsets = [0, 128], sizes = [2, 128], strides = [1, 1]} : vector<2x384xf32> to vector<2x128xf32>
    %161 = vector.extract_strided_slice %156 {offsets = [0, 256], sizes = [2, 128], strides = [1, 1]} : vector<2x384xf32> to vector<2x128xf32>
    %162 = vector.extract_strided_slice %158 {offsets = [0, 0], sizes = [2, 128], strides = [1, 1]} : vector<2x384xf32> to vector<2x128xf32>
    %163 = vector.extract_strided_slice %158 {offsets = [0, 128], sizes = [2, 128], strides = [1, 1]} : vector<2x384xf32> to vector<2x128xf32>
    %164 = vector.extract_strided_slice %158 {offsets = [0, 256], sizes = [2, 128], strides = [1, 1]} : vector<2x384xf32> to vector<2x128xf32>
    %165 = arith.addf %159, %162 : vector<2x128xf32>
    %166 = arith.negf %165 : vector<2x128xf32>
    %167 = math.exp %166 : vector<2x128xf32>
    %cst_32 = arith.constant 1.000000e+00 : f32
    %168 = vector.broadcast %cst_32 : f32 to vector<2x128xf32>
    %169 = arith.addf %168, %167 : vector<2x128xf32>
    %170 = arith.divf %168, %169 : vector<2x128xf32>
    %171 = arith.addf %160, %163 : vector<2x128xf32>
    %172 = arith.negf %171 : vector<2x128xf32>
    %173 = math.exp %172 : vector<2x128xf32>
    %cst_33 = arith.constant 1.000000e+00 : f32
    %174 = vector.broadcast %cst_33 : f32 to vector<2x128xf32>
    %175 = arith.addf %174, %173 : vector<2x128xf32>
    %176 = arith.divf %174, %175 : vector<2x128xf32>
    %177 = arith.mulf %170, %164 : vector<2x128xf32>
    %178 = arith.addf %161, %177 : vector<2x128xf32>
    %179 = math.tanh %178 : vector<2x128xf32>
    %cst_34 = arith.constant 1.000000e+00 : f32
    %180 = vector.broadcast %cst_34 : f32 to vector<2x128xf32>
    %181 = arith.subf %180, %176 : vector<2x128xf32>
    %182 = arith.mulf %181, %179 : vector<2x128xf32>
    %183 = arith.mulf %176, %155 : vector<2x128xf32>
    %184 = arith.addf %182, %183 : vector<2x128xf32>
    %185 = vector.extract_strided_slice %5 {offsets = [2, 0], sizes = [2, 384], strides = [1, 1]} : vector<16x384xf32> to vector<2x384xf32>
    %cst_35 = arith.constant dense<0.000000e+00> : vector<2x384xf32>
    %186 = tpu.matmul %184, %6, %cst_35 {dimension_numbers = #tpu.dot_dimension_numbers<[1], [0], [0], [1], [0, 0, 1, 1], [], []>} : vector<2x128xf32>, vector<128x384xf32>, vector<2x384xf32> -> vector<2x384xf32>
    %187 = arith.addf %186, %9 : vector<2x384xf32>
    %188 = vector.extract_strided_slice %185 {offsets = [0, 0], sizes = [2, 128], strides = [1, 1]} : vector<2x384xf32> to vector<2x128xf32>
    %189 = vector.extract_strided_slice %185 {offsets = [0, 128], sizes = [2, 128], strides = [1, 1]} : vector<2x384xf32> to vector<2x128xf32>
    %190 = vector.extract_strided_slice %185 {offsets = [0, 256], sizes = [2, 128], strides = [1, 1]} : vector<2x384xf32> to vector<2x128xf32>
    %191 = vector.extract_strided_slice %187 {offsets = [0, 0], sizes = [2, 128], strides = [1, 1]} : vector<2x384xf32> to vector<2x128xf32>
    %192 = vector.extract_strided_slice %187 {offsets = [0, 128], sizes = [2, 128], strides = [1, 1]} : vector<2x384xf32> to vector<2x128xf32>
    %193 = vector.extract_strided_slice %187 {offsets = [0, 256], sizes = [2, 128], strides = [1, 1]} : vector<2x384xf32> to vector<2x128xf32>
    %194 = arith.addf %188, %191 : vector<2x128xf32>
    %195 = arith.negf %194 : vector<2x128xf32>
    %196 = math.exp %195 : vector<2x128xf32>
    %cst_36 = arith.constant 1.000000e+00 : f32
    %197 = vector.broadcast %cst_36 : f32 to vector<2x128xf32>
    %198 = arith.addf %197, %196 : vector<2x128xf32>
    %199 = arith.divf %197, %198 : vector<2x128xf32>
    %200 = arith.addf %189, %192 : vector<2x128xf32>
    %201 = arith.negf %200 : vector<2x128xf32>
    %202 = math.exp %201 : vector<2x128xf32>
    %cst_37 = arith.constant 1.000000e+00 : f32
    %203 = vector.broadcast %cst_37 : f32 to vector<2x128xf32>
    %204 = arith.addf %203, %202 : vector<2x128xf32>
    %205 = arith.divf %203, %204 : vector<2x128xf32>
    %206 = arith.mulf %199, %193 : vector<2x128xf32>
    %207 = arith.addf %190, %206 : vector<2x128xf32>
    %208 = math.tanh %207 : vector<2x128xf32>
    %cst_38 = arith.constant 1.000000e+00 : f32
    %209 = vector.broadcast %cst_38 : f32 to vector<2x128xf32>
    %210 = arith.subf %209, %205 : vector<2x128xf32>
    %211 = arith.mulf %210, %208 : vector<2x128xf32>
    %212 = arith.mulf %205, %184 : vector<2x128xf32>
    %213 = arith.addf %211, %212 : vector<2x128xf32>
    %214 = vector.extract_strided_slice %5 {offsets = [0, 0], sizes = [2, 384], strides = [1, 1]} : vector<16x384xf32> to vector<2x384xf32>
    %cst_39 = arith.constant dense<0.000000e+00> : vector<2x384xf32>
    %215 = tpu.matmul %213, %6, %cst_39 {dimension_numbers = #tpu.dot_dimension_numbers<[1], [0], [0], [1], [0, 0, 1, 1], [], []>} : vector<2x128xf32>, vector<128x384xf32>, vector<2x384xf32> -> vector<2x384xf32>
    %216 = arith.addf %215, %9 : vector<2x384xf32>
    %217 = vector.extract_strided_slice %214 {offsets = [0, 0], sizes = [2, 128], strides = [1, 1]} : vector<2x384xf32> to vector<2x128xf32>
    %218 = vector.extract_strided_slice %214 {offsets = [0, 128], sizes = [2, 128], strides = [1, 1]} : vector<2x384xf32> to vector<2x128xf32>
    %219 = vector.extract_strided_slice %214 {offsets = [0, 256], sizes = [2, 128], strides = [1, 1]} : vector<2x384xf32> to vector<2x128xf32>
    %220 = vector.extract_strided_slice %216 {offsets = [0, 0], sizes = [2, 128], strides = [1, 1]} : vector<2x384xf32> to vector<2x128xf32>
    %221 = vector.extract_strided_slice %216 {offsets = [0, 128], sizes = [2, 128], strides = [1, 1]} : vector<2x384xf32> to vector<2x128xf32>
    %222 = vector.extract_strided_slice %216 {offsets = [0, 256], sizes = [2, 128], strides = [1, 1]} : vector<2x384xf32> to vector<2x128xf32>
    %223 = arith.addf %217, %220 : vector<2x128xf32>
    %224 = arith.negf %223 : vector<2x128xf32>
    %225 = math.exp %224 : vector<2x128xf32>
    %cst_40 = arith.constant 1.000000e+00 : f32
    %226 = vector.broadcast %cst_40 : f32 to vector<2x128xf32>
    %227 = arith.addf %226, %225 : vector<2x128xf32>
    %228 = arith.divf %226, %227 : vector<2x128xf32>
    %229 = arith.addf %218, %221 : vector<2x128xf32>
    %230 = arith.negf %229 : vector<2x128xf32>
    %231 = math.exp %230 : vector<2x128xf32>
    %cst_41 = arith.constant 1.000000e+00 : f32
    %232 = vector.broadcast %cst_41 : f32 to vector<2x128xf32>
    %233 = arith.addf %232, %231 : vector<2x128xf32>
    %234 = arith.divf %232, %233 : vector<2x128xf32>
    %235 = arith.mulf %228, %222 : vector<2x128xf32>
    %236 = arith.addf %219, %235 : vector<2x128xf32>
    %237 = math.tanh %236 : vector<2x128xf32>
    %cst_42 = arith.constant 1.000000e+00 : f32
    %238 = vector.broadcast %cst_42 : f32 to vector<2x128xf32>
    %239 = arith.subf %238, %234 : vector<2x128xf32>
    %240 = arith.mulf %239, %237 : vector<2x128xf32>
    %241 = arith.mulf %234, %213 : vector<2x128xf32>
    %242 = arith.addf %240, %241 : vector<2x128xf32>
    %c0_43 = arith.constant 0 : index
    %c0_44 = arith.constant 0 : index
    %243 = vector.load %arg7[%c0_43, %c0_44] : memref<128x41xf32, #tpu.memory_space<vmem>>, vector<128x41xf32>
    %cst_45 = arith.constant dense<0.000000e+00> : vector<2x41xf32>
    %244 = tpu.matmul %242, %243, %cst_45 {dimension_numbers = #tpu.dot_dimension_numbers<[1], [0], [0], [1], [0, 0, 1, 1], [], []>} : vector<2x128xf32>, vector<128x41xf32>, vector<2x41xf32> -> vector<2x41xf32>
    %c0_46 = arith.constant 0 : index
    %c0_47 = arith.constant 0 : index
    %245 = vector.load %arg8[%c0_46, %c0_47] : memref<1x41xf32, #tpu.memory_space<vmem>>, vector<1x41xf32>
    %246 = vector.broadcast %245 : vector<1x41xf32> to vector<2x41xf32>
    %247 = arith.addf %244, %246 : vector<2x41xf32>
    %cst_48 = arith.constant dense<0xFF800000> : vector<2xf32>
    %248 = vector.multi_reduction <maximumf>, %247, %cst_48 [1] : vector<2x41xf32> to vector<2xf32>
    %249 = vector.shape_cast %248 : vector<2xf32> to vector<2x1xf32>
    %250 = vector.broadcast %249 : vector<2x1xf32> to vector<2x41xf32>
    %251 = arith.subf %247, %250 : vector<2x41xf32>
    %252 = math.exp %251 : vector<2x41xf32>
    %cst_49 = arith.constant dense<0.000000e+00> : vector<2xf32>
    %253 = vector.multi_reduction <add>, %252, %cst_49 [1] : vector<2x41xf32> to vector<2xf32>
    %254 = vector.shape_cast %253 : vector<2xf32> to vector<2x1xf32>
    %255 = math.log %254 : vector<2x1xf32>
    %256 = vector.broadcast %255 : vector<2x1xf32> to vector<2x41xf32>
    %257 = arith.subf %251, %256 : vector<2x41xf32>
    %c0_50 = arith.constant 0 : index
    %c0_51 = arith.constant 0 : index
    %258 = vector.load %arg9[%c0_50, %c0_51] : memref<2x41xf32, #tpu.memory_space<vmem>>, vector<2x41xf32>
    tpu.vector_store %arg9[%c0_50, %c0_51], %257 {strides = array<i32>} : memref<2x41xf32, #tpu.memory_space<vmem>>, vector<2x41xf32>,
    return
  }
  func.func @transform_0(%arg0: i32) -> (i32, i32) {
    %c0_i32 = arith.constant 0 : i32
    %c0_i32_0 = arith.constant 0 : i32
    %c0_i32_1 = arith.constant 0 : i32
    return %c0_i32, %c0_i32_0 : i32, i32
  }
  func.func @transform_1(%arg0: i32) -> (i32, i32) {
    %c0_i32 = arith.constant 0 : i32
    %c0_i32_0 = arith.constant 0 : i32
    %c0_i32_1 = arith.constant 0 : i32
    return %c0_i32, %c0_i32_0 : i32, i32
  }
  func.func @transform_2(%arg0: i32) -> (i32, i32) {
    %c0_i32 = arith.constant 0 : i32
    %c0_i32_0 = arith.constant 0 : i32
    %c0_i32_1 = arith.constant 0 : i32
    return %c0_i32, %c0_i32_0 : i32, i32
  }
  func.func @transform_3(%arg0: i32) -> (i32, i32) {
    %c0_i32 = arith.constant 0 : i32
    %c0_i32_0 = arith.constant 0 : i32
    %c0_i32_1 = arith.constant 0 : i32
    return %c0_i32, %c0_i32_0 : i32, i32
  }
  func.func @transform_4(%arg0: i32) -> (i32, i32) {
    %c0_i32 = arith.constant 0 : i32
    %c0_i32_0 = arith.constant 0 : i32
    %c0_i32_1 = arith.constant 0 : i32
    return %c0_i32, %c0_i32_0 : i32, i32
  }
  func.func @transform_5(%arg0: i32) -> (i32, i32) {
    %c0_i32 = arith.constant 0 : i32
    %c0_i32_0 = arith.constant 0 : i32
    %c0_i32_1 = arith.constant 0 : i32
    return %c0_i32, %c0_i32_0 : i32, i32
  }
  func.func @transform_6(%arg0: i32) -> (i32, i32) {
    %c0_i32 = arith.constant 0 : i32
    %c0_i32_0 = arith.constant 0 : i32
    %c0_i32_1 = arith.constant 0 : i32
    return %c0_i32, %c0_i32_0 : i32, i32
  }
  func.func @transform_7(%arg0: i32) -> (i32, i32) {
    %c0_i32 = arith.constant 0 : i32
    %c0_i32_0 = arith.constant 0 : i32
    %c0_i32_1 = arith.constant 0 : i32
    return %c0_i32, %c0_i32_0 : i32, i32
  }
  func.func @transform_8(%arg0: i32) -> (i32, i32) {
    %c0_i32 = arith.constant 0 : i32
    %c0_i32_0 = arith.constant 0 : i32
    %c0_i32_1 = arith.constant 0 : i32
    return %c0_i32, %c0_i32_0 : i32, i32
  }
}

</mosaic_0001>

<llo_original>
// kernel: tpu_custom_call.1
$region0: #{tpu_custom_call.1}
  #allocation0 [shape = 'u32[]', space=smem, size = 0x4, offset = 0x4, fixed_abs, tag = 'smem constant byte address 0x4 - core index']
  #allocation1 [shape = 'u32[144,128]{1,0:T(1,128)}', space=vmem, size = 0x12000, scoped, tag = 'internal scratch']
  %s0 = inlined_call_operand.vmem [shape: f32[16,32], index: 0, kind: input, shape index: {}]
  %s1 = inlined_call_operand.vmem [shape: f32[2,128], index: 1, kind: input, shape index: {}]
  %s2 = inlined_call_operand.vmem [shape: f32[32,384], index: 2, kind: input, shape index: {}]
  %s3 = inlined_call_operand.hbm [shape: f32[128,384], index: 3, kind: input, shape index: {}]
  %s4 = inlined_call_operand.vmem [shape: f32[1,384], index: 4, kind: input, shape index: {}]
  %s5 = inlined_call_operand.vmem [shape: f32[1,384], index: 5, kind: input, shape index: {}]
  %s6 = inlined_call_operand.vmem [shape: f32[128,41], index: 6, kind: input, shape index: {}]
  %s7 = inlined_call_operand.vmem [shape: f32[1,41], index: 7, kind: input, shape index: {}]
  %s8 = inlined_call_operand.hbm [shape: f32[2,41], index: 8, kind: output, shape index: {}]
  %s9 = sld [smem:[#allocation0]]
  $region46: #{tpu_custom_call.1} parent=0
    _
  %s11 = ssub.s32 1, %s9
  %s12 = scalar_select 0, %s11, %s9
  $region1: #{tpu_custom_call.1} parent=0
    #allocation2 [shape = 'u8[196608]{0}', space=vmem, size = 0x30000, scoped, tag = 'input window, operand 3, single buffered']
    #allocation3 [shape = 's32[1]{0}', space=sflag, size = 0x4, scoped, tag = 'scoped memory for tpu_custom_call.1']
    #allocation4 [shape = 's32[1]{0}', space=sflag, size = 0x4, scoped, tag = 'scoped memory for tpu_custom_call.1']
    #allocation5 [shape = 'u8[1024]{0}', space=vmem, size = 0x400, scoped, tag = 'output window, operand 0, single buffered']
    %13 = vsyncpa [#allocation3], 0
    %14 = vsyncpa [#allocation4], 0
    // Predicated region
    $region2: #{tpu_custom_call.1} parent=1 // pred_check
      _
    $region3: #{tpu_custom_call.1} parent=1 // pred_check_branch
      %16 = sbr.rel (0) target = $region5
    $region4: #{tpu_custom_call.1} parent=1 // pred_region
      _
    $region5: #{tpu_custom_call.1} parent=1 // pred_fallthru
      _
    // Predicated region
    $region6: #{tpu_custom_call.1} parent=1 // pred_check
      _
    $region7: #{tpu_custom_call.1} parent=1 // pred_check_branch
      %18 = sbr.rel (0) target = $region9
    $region8: #{tpu_custom_call.1} parent=1 // pred_region
      _
    $region9: #{tpu_custom_call.1} parent=1 // pred_fallthru
      _
    // Predicated region
    $region10: #{tpu_custom_call.1} parent=1 // pred_check
      _
    $region11: #{tpu_custom_call.1} parent=1 // pred_check_branch
      %20 = sbr.rel (0) target = $region13
    $region12: #{tpu_custom_call.1} parent=1 // pred_region
      _
    $region13: #{tpu_custom_call.1} parent=1 // pred_fallthru
      _
    // Predicated region
    $region14: #{tpu_custom_call.1} parent=1 // pred_check
      _
    $region15: #{tpu_custom_call.1} parent=1 // pred_check_branch
      %22 = sbr.rel (0) target = $region17
    $region16: #{tpu_custom_call.1} parent=1 // pred_region
      %s24 = ssub.s32 6144, 6144
      %25 = vsyncadd [#allocation3], %s24
      %s26 = sshll.u32 [#allocation2], 4
      %s27 = int_to_ptr.vmem [resolvable:$true] %s26
      %32 = dma.hbm_to_vmem [thread:$0]  %s3, 6144, %s27, [#allocation3], 384, 384, 24
    $region17: #{tpu_custom_call.1} parent=1 // pred_fallthru
      _
    // Predicated region
    $region18: #{tpu_custom_call.1} parent=1 // pred_check
      _
    $region19: #{tpu_custom_call.1} parent=1 // pred_check_branch
      %34 = sbr.rel (0) target = $region21
    $region20: #{tpu_custom_call.1} parent=1 // pred_region
      _
    $region21: #{tpu_custom_call.1} parent=1 // pred_fallthru
      _
    // Predicated region
    $region22: #{tpu_custom_call.1} parent=1 // pred_check
      _
    $region23: #{tpu_custom_call.1} parent=1 // pred_check_branch
      %36 = sbr.rel (0) target = $region25
    $region24: #{tpu_custom_call.1} parent=1 // pred_region
      _
    $region25: #{tpu_custom_call.1} parent=1 // pred_fallthru
      _
    // Predicated region
    $region26: #{tpu_custom_call.1} parent=1 // pred_check
      _
    $region27: #{tpu_custom_call.1} parent=1 // pred_check_branch
      %38 = sbr.rel (0) target = $region29
    $region28: #{tpu_custom_call.1} parent=1 // pred_region
      _
    $region29: #{tpu_custom_call.1} parent=1 // pred_fallthru
      _
    // Predicated region
    $region30: #{tpu_custom_call.1} parent=1 // pred_check
      _
    $region31: #{tpu_custom_call.1} parent=1 // pred_check_branch
      %40 = sbr.rel (0) target = $region33
    $region32: #{tpu_custom_call.1} parent=1 // pred_region
      _
    $region33: #{tpu_custom_call.1} parent=1 // pred_fallthru
      _
    // Predicated region
    $region34: #{tpu_custom_call.1} parent=1 // pred_check
      _
    $region35: #{tpu_custom_call.1} parent=1 // pred_check_branch
      %42 = sbr.rel (0) target = $region37
    $region36: #{tpu_custom_call.1} parent=1 // pred_region
      %43 = dma.done [#allocation3], 6144
    $region37: #{tpu_custom_call.1} parent=1 // pred_fallthru
      _
    %v44 = vld [vmem:[%s0] sm:$0xff]
    %v45 = vld [vmem:[%s0 + $0x8] sm:$0xff]
    %v46 = vld [vmem:[%s2] sm:$0xff]
    %v47 = vld [vmem:[%s2 + $0x8] sm:$0xff]
    %v48 = vld [vmem:[%s2 + $0x10] sm:$0xff]
    %v49 = vld [vmem:[%s2 + $0x18] sm:$0xff]
    %v50 = vld [vmem:[%s2 + $0x20] sm:$0xff]
    %v51 = vld [vmem:[%s2 + $0x28] sm:$0xff]
    %v52 = vld [vmem:[%s2 + $0x30] sm:$0xff]
    %v53 = vld [vmem:[%s2 + $0x38] sm:$0xff]
    %v54 = vld [vmem:[%s2 + $0x40] sm:$0xff]
    %v55 = vld [vmem:[%s2 + $0x48] sm:$0xff]
    %v56 = vld [vmem:[%s2 + $0x50] sm:$0xff]
    %v57 = vld [vmem:[%s2 + $0x58] sm:$0xff]
    %v58 = vld [vmem:[%s4] sm:$0x7]
    %v60 = vlaneseq
    %v61 = vshrl.u32 %v60, 7
    %v62 = vsub.s32 0, %v61
    %v63 = vrot.slane %v58, %v62
    %v64 = vlaneseq
    %v65 = vshrl.u32 %v64, 7
    %v66 = vsub.s32 1, %v65
    %v67 = vrot.slane %v58, %v66
    %v68 = vlaneseq
    %v69 = vshrl.u32 %v68, 7
    %v70 = vsub.s32 2, %v69
    %v71 = vrot.slane %v58, %v70
    %vm75 = vcmask 261120
    %v77 = vsel %vm75, %v44, 0
    %v80 = vsel %vm75, %v45, 0
    %82 = vmatprep.subr.mxu0 %v47
    %83 = vmatpush1.msra.mxu0 %v46
    %84 = vmatprep.subr.mxu0 %v50
    %85 = vmatpush1.msra.mxu0 %v49
    %86 = vmatprep.subr.mxu0 %v53
    %87 = vmatpush1.msra.mxu0 %v52
    %88 = vmatprep.subr.mxu0 %v56
    %89 = vmatpush1.msra.mxu0 %v55
    %90 = vmatprep.subr.mxu0 0.0
    %91 = vmatpush1.msra.mxu0 0.0
    %92 = vmatprep.subr.mxu0 0.0
    %93 = vmatpush1.msra.mxu0 0.0
    %94 = vmatprep.subr.mxu0 0.0
    %95 = vmatpush1.msra.mxu0 0.0
    %96 = vmatprep.subr.mxu0 0.0
    %97 = vmatpush1.msra.mxu0 0.0
    %98 = vmatprep.subr.mxu0 0.0
    %99 = vmatpush1.msra.mxu0 0.0
    %100 = vmatprep.subr.mxu0 0.0
    %101 = vmatpush1.msra.mxu0 0.0
    %102 = vmatprep.subr.mxu0 0.0
    %103 = vmatpush1.msra.mxu0 0.0
    %104 = vmatprep.subr.mxu0 0.0
    %105 = vmatpush1.msra.mxu0 0.0
    %106 = vmatprep.subr.mxu0 0.0
    %107 = vmatpush1.msra.mxu0 0.0
    %108 = vmatprep.subr.mxu0 0.0
    %109 = vmatpush1.msra.mxu0 0.0
    %110 = vmatprep.subr.mxu0 0.0
    %111 = vmatpush1.msra.mxu0 0.0
    %112 = vmatprep.subr.mxu0 0.0
    %113 = vmatpush1.msra.mxu0 0.0
    %114 = vmatprep.subr.mxu0 0.0
    %115 = vmatpush1.msra.mxu0 0.0
    %116 = vmatprep.subr.mxu0 0.0
    %117 = vmatpush1.msra.mxu0 0.0
    %118 = vmatprep.subr.mxu0 0.0
    %119 = vmatpush1.msra.mxu0 0.0
    %120 = vmatprep.subr.mxu0 0.0
    %121 = vmatpush1.msra.mxu0 0.0
    %122 = vmatprep.subr.mxu0 0.0
    %123 = vmatpush1.msra.mxu0 0.0
    %124 = vmatprep.subr.mxu0 0.0
    %125 = vmatpush1.msra.mxu0 0.0
    %126 = vmatprep.subr.mxu0 0.0
    %127 = vmatpush1.msra.mxu0 0.0
    %128 = vmatprep.subr.mxu0 0.0
    %129 = vmatpush1.msra.mxu0 0.0
    %130 = vmatprep.subr.mxu0 0.0
    %131 = vmatpush1.msra.mxu0 0.0
    %132 = vmatprep.subr.mxu0 0.0
    %133 = vmatpush1.msra.mxu0 0.0
    %134 = vmatprep.subr.mxu0 0.0
    %135 = vmatpush1.msra.mxu0 0.0
    %136 = vmatprep.subr.mxu0 0.0
    %137 = vmatpush1.msra.mxu0 0.0
    %138 = vmatprep.subr.mxu0 0.0
    %139 = vmatpush1.msra.mxu0 0.0
    %140 = vmatprep.subr.mxu0 0.0
    %141 = vmatpush1.msra.mxu0 0.0
    %142 = vmatprep.subr.mxu0 0.0
    %143 = vmatpush1.msra.mxu0 0.0
    %144 = vmatprep.subr.mxu0 0.0
    %145 = vmatpush1.msra.mxu0 0.0
    %146 = vmatprep.mubr.f32.mxu0 0.0
    %147 = vmatmul.mubr.f32.gmra.mrb[0].mxu0 %v77
    %v148 = vpop.f32.mrb[0].mxu0
    %v149 = vadd.f32 %v63, %v148
    %v150 = vpop.f32.mrb[0].mxu0
    %v151 = vadd.f32 %v67, %v150
    %152 = vmatprep.mubr.f32.mxu0 0.0
    %153 = vmatmul.mubr.f32.gmra.mrb[0].mxu0 %v80
    %v154 = vpop.f32.mrb[0].mxu0
    %v155 = vadd.f32 %v63, %v154
    %v156 = vpop.f32.mrb[0].mxu0
    %v157 = vadd.f32 %v67, %v156
    %158 = vdwg.mxu0
    %159 = vmatprep.subr.mxu0 0.0
    %160 = vmatpush1.msra.mxu0 %v48
    %161 = vmatprep.subr.mxu0 0.0
    %162 = vmatpush1.msra.mxu0 %v51
    %163 = vmatprep.subr.mxu0 0.0
    %164 = vmatpush1.msra.mxu0 %v54
    %165 = vmatprep.subr.mxu0 0.0
    %166 = vmatpush1.msra.mxu0 %v57
    %167 = vmatprep.subr.mxu0 0.0
    %168 = vmatpush1.msra.mxu0 0.0
    %169 = vmatprep.subr.mxu0 0.0
    %170 = vmatpush1.msra.mxu0 0.0
    %171 = vmatprep.subr.mxu0 0.0
    %172 = vmatpush1.msra.mxu0 0.0
    %173 = vmatprep.subr.mxu0 0.0
    %174 = vmatpush1.msra.mxu0 0.0
    %175 = vmatprep.subr.mxu0 0.0
    %176 = vmatpush1.msra.mxu0 0.0
    %177 = vmatprep.subr.mxu0 0.0
    %178 = vmatpush1.msra.mxu0 0.0
    %179 = vmatprep.subr.mxu0 0.0
    %180 = vmatpush1.msra.mxu0 0.0
    %181 = vmatprep.subr.mxu0 0.0
    %182 = vmatpush1.msra.mxu0 0.0
    %183 = vmatprep.subr.mxu0 0.0
    %184 = vmatpush1.msra.mxu0 0.0
    %185 = vmatprep.subr.mxu0 0.0
    %186 = vmatpush1.msra.mxu0 0.0
    %187 = vmatprep.subr.mxu0 0.0
    %188 = vmatpush1.msra.mxu0 0.0
    %189 = vmatprep.subr.mxu0 0.0
    %190 = vmatpush1.msra.mxu0 0.0
    %191 = vmatprep.subr.mxu0 0.0
    %192 = vmatpush1.msra.mxu0 0.0
    %193 = vmatprep.subr.mxu0 0.0
    %194 = vmatpush1.msra.mxu0 0.0
    %195 = vmatprep.subr.mxu0 0.0
    %196 = vmatpush1.msra.mxu0 0.0
    %197 = vmatprep.subr.mxu0 0.0
    %198 = vmatpush1.msra.mxu0 0.0
    %199 = vmatprep.subr.mxu0 0.0
    %200 = vmatpush1.msra.mxu0 0.0
    %201 = vmatprep.subr.mxu0 0.0
    %202 = vmatpush1.msra.mxu0 0.0
    %203 = vmatprep.subr.mxu0 0.0
    %204 = vmatpush1.msra.mxu0 0.0
    %205 = vmatprep.subr.mxu0 0.0
    %206 = vmatpush1.msra.mxu0 0.0
    %207 = vmatprep.subr.mxu0 0.0
    %208 = vmatpush1.msra.mxu0 0.0
    %209 = vmatprep.subr.mxu0 0.0
    %210 = vmatpush1.msra.mxu0 0.0
    %211 = vmatprep.subr.mxu0 0.0
    %212 = vmatpush1.msra.mxu0 0.0
    %213 = vmatprep.subr.mxu0 0.0
    %214 = vmatpush1.msra.mxu0 0.0
    %215 = vmatprep.subr.mxu0 0.0
    %216 = vmatpush1.msra.mxu0 0.0
    %217 = vmatprep.subr.mxu0 0.0
    %218 = vmatpush1.msra.mxu0 0.0
    %219 = vmatprep.subr.mxu0 0.0
    %220 = vmatpush1.msra.mxu0 0.0
    %221 = vmatprep.subr.mxu0 0.0
    %222 = vmatpush1.msra.mxu0 0.0
    %223 = vmatprep.mubr.f32.mxu0 0.0
    %224 = vmatmul.mubr.f32.gmra.mrb[0].mxu0 %v77
    %v225 = vpop.f32.mrb[0].mxu0
    %v226 = vadd.f32 %v71, %v225
    %v227 = vpop.f32.mrb[0].mxu0
    %228 = vmatprep.mubr.f32.mxu0 0.0
    %229 = vmatmul.mubr.f32.gmra.mrb[0].mxu0 %v80
    %v230 = vpop.f32.mrb[0].mxu0
    %v231 = vadd.f32 %v71, %v230
    %v232 = vpop.f32.mrb[0].mxu0
    %233 = vdwg.mxu0
    %v234 = vld [vmem:[#allocation2] sm:$0xff]
    %v235 = vld [vmem:[#allocation2 + $0x8] sm:$0xff]
    %v236 = vld [vmem:[#allocation2 + $0x10] sm:$0xff]
    %v237 = vld [vmem:[#allocation2 + $0x18] sm:$0xff]
    %v238 = vld [vmem:[#allocation2 + $0x20] sm:$0xff]
    %v239 = vld [vmem:[#allocation2 + $0x28] sm:$0xff]
    %v240 = vld [vmem:[#allocation2 + $0x30] sm:$0xff]
    %v241 = vld [vmem:[#allocation2 + $0x38] sm:$0xff]
    %v242 = vld [vmem:[#allocation2 + $0x40] sm:$0xff]
    %v243 = vld [vmem:[#allocation2 + $0x48] sm:$0xff]
    %v244 = vld [vmem:[#allocation2 + $0x50] sm:$0xff]
    %v245 = vld [vmem:[#allocation2 + $0x58] sm:$0xff]
    %v246 = vld [vmem:[#allocation2 + $0x60] sm:$0xff]
    %v247 = vld [vmem:[#allocation2 + $0x68] sm:$0xff]
    %v248 = vld [vmem:[#allocation2 + $0x70] sm:$0xff]
    %v249 = vld [vmem:[#allocation2 + $0x78] sm:$0xff]
    %v250 = vld [vmem:[#allocation2 + $0x80] sm:$0xff]
    %v251 = vld [vmem:[#allocation2 + $0x88] sm:$0xff]
    %v252 = vld [vmem:[#allocation2 + $0x90] sm:$0xff]
    %v253 = vld [vmem:[#allocation2 + $0x98] sm:$0xff]
    %v254 = vld [vmem:[#allocation2 + $0xa0] sm:$0xff]
    %v255 = vld [vmem:[#allocation2 + $0xa8] sm:$0xff]
    %v256 = vld [vmem:[#allocation2 + $0xb0] sm:$0xff]
    %v257 = vld [vmem:[#allocation2 + $0xb8] sm:$0xff]
    %v258 = vld [vmem:[#allocation2 + $0xc0] sm:$0xff]
    %v259 = vld [vmem:[#allocation2 + $0xc8] sm:$0xff]
    %v260 = vld [vmem:[#allocation2 + $0xd0] sm:$0xff]
    %v261 = vld [vmem:[#allocation2 + $0xd8] sm:$0xff]
    %v262 = vld [vmem:[#allocation2 + $0xe0] sm:$0xff]
    %v263 = vld [vmem:[#allocation2 + $0xe8] sm:$0xff]
    %v264 = vld [vmem:[#allocation2 + $0xf0] sm:$0xff]
    %v265 = vld [vmem:[#allocation2 + $0xf8] sm:$0xff]
    %v266 = vld [vmem:[#allocation2 + $0x100] sm:$0xff]
    %v267 = vld [vmem:[#allocation2 + $0x108] sm:$0xff]
    %v268 = vld [vmem:[#allocation2 + $0x110] sm:$0xff]
    %v269 = vld [vmem:[#allocation2 + $0x118] sm:$0xff]
    %v270 = vld [vmem:[#allocation2 + $0x120] sm:$0xff]
    %v271 = vld [vmem:[#allocation2 + $0x128] sm:$0xff]
    %v272 = vld [vmem:[#allocation2 + $0x130] sm:$0xff]
    %v273 = vld [vmem:[#allocation2 + $0x138] sm:$0xff]
    %v274 = vld [vmem:[#allocation2 + $0x140] sm:$0xff]
    %v275 = vld [vmem:[#allocation2 + $0x148] sm:$0xff]
    %v276 = vld [vmem:[#allocation2 + $0x150] sm:$0xff]
    %v277 = vld [vmem:[#allocation2 + $0x158] sm:$0xff]
    %v278 = vld [vmem:[#allocation2 + $0x160] sm:$0xff]
    %v279 = vld [vmem:[#allocation2 + $0x168] sm:$0xff]
    %v280 = vld [vmem:[#allocation2 + $0x170] sm:$0xff]
    %v281 = vld [vmem:[#allocation2 + $0x178] sm:$0xff]
    %v282 = vld [vmem:[%s5] sm:$0x7]
    %v284 = vlaneseq
    %v285 = vshrl.u32 %v284, 7
    %v286 = vsub.s32 0, %v285
    %v287 = vrot.slane %v282, %v286
    %v288 = vlaneseq
    %v289 = vshrl.u32 %v288, 7
    %v290 = vsub.s32 1, %v289
    %v291 = vrot.slane %v282, %v290
    %v292 = vlaneseq
    %v293 = vshrl.u32 %v292, 7
    %v294 = vsub.s32 2, %v293
    %v295 = vrot.slane %v282, %v294
    %v299 = vld [vmem:[%s1] sm:$0x3]
    %300 = vmatprep.subr.mxu0 %v235
    %301 = vmatpush1.msra.mxu0 %v234
    %302 = vmatprep.subr.mxu0 %v238
    %303 = vmatpush1.msra.mxu0 %v237
    %304 = vmatprep.subr.mxu0 %v241
    %305 = vmatpush1.msra.mxu0 %v240
    %306 = vmatprep.subr.mxu0 %v244
    %307 = vmatpush1.msra.mxu0 %v243
    %308 = vmatprep.subr.mxu0 %v247
    %309 = vmatpush1.msra.mxu0 %v246
    %310 = vmatprep.subr.mxu0 %v250
    %311 = vmatpush1.msra.mxu0 %v249
    %312 = vmatprep.subr.mxu0 %v253
    %313 = vmatpush1.msra.mxu0 %v252
    %314 = vmatprep.subr.mxu0 %v256
    %315 = vmatpush1.msra.mxu0 %v255
    %316 = vmatprep.subr.mxu0 %v259
    %317 = vmatpush1.msra.mxu0 %v258
    %318 = vmatprep.subr.mxu0 %v262
    %319 = vmatpush1.msra.mxu0 %v261
    %320 = vmatprep.subr.mxu0 %v265
    %321 = vmatpush1.msra.mxu0 %v264
    %322 = vmatprep.subr.mxu0 %v268
    %323 = vmatpush1.msra.mxu0 %v267
    %324 = vmatprep.subr.mxu0 %v271
    %325 = vmatpush1.msra.mxu0 %v270
    %326 = vmatprep.subr.mxu0 %v274
    %327 = vmatpush1.msra.mxu0 %v273
    %328 = vmatprep.subr.mxu0 %v277
    %329 = vmatpush1.msra.mxu0 %v276
    %330 = vmatprep.subr.mxu0 %v280
    %331 = vmatpush1.msra.mxu0 %v279
    %332 = vmatprep.subr.mxu0 0.0
    %333 = vmatpush1.msra.mxu0 0.0
    %334 = vmatprep.subr.mxu0 0.0
    %335 = vmatpush1.msra.mxu0 0.0
    %336 = vmatprep.subr.mxu0 0.0
    %337 = vmatpush1.msra.mxu0 0.0
    %338 = vmatprep.subr.mxu0 0.0
    %339 = vmatpush1.msra.mxu0 0.0
    %340 = vmatprep.subr.mxu0 0.0
    %341 = vmatpush1.msra.mxu0 0.0
    %342 = vmatprep.subr.mxu0 0.0
    %343 = vmatpush1.msra.mxu0 0.0
    %344 = vmatprep.subr.mxu0 0.0
    %345 = vmatpush1.msra.mxu0 0.0
    %346 = vmatprep.subr.mxu0 0.0
    %347 = vmatpush1.msra.mxu0 0.0
    %348 = vmatprep.subr.mxu0 0.0
    %349 = vmatpush1.msra.mxu0 0.0
    %350 = vmatprep.subr.mxu0 0.0
    %351 = vmatpush1.msra.mxu0 0.0
    %352 = vmatprep.subr.mxu0 0.0
    %353 = vmatpush1.msra.mxu0 0.0
    %354 = vmatprep.subr.mxu0 0.0
    %355 = vmatpush1.msra.mxu0 0.0
    %356 = vmatprep.subr.mxu0 0.0
    %357 = vmatpush1.msra.mxu0 0.0
    %358 = vmatprep.subr.mxu0 0.0
    %359 = vmatpush1.msra.mxu0 0.0
    %360 = vmatprep.subr.mxu0 0.0
    %361 = vmatpush1.msra.mxu0 0.0
    %362 = vmatprep.subr.mxu0 0.0
    %363 = vmatpush1.msra.mxu0 0.0
    %364 = vmatprep.mubr.f32.mxu0 0.0
    %365 = vmatmul.mubr.f32.gmra.mrb[0].mxu0 %v299
    %v366 = vpop.f32.mrb[0].mxu0
    %v367 = vadd.f32 %v287, %v366
    %v368 = vpop.f32.mrb[0].mxu0
    %v369 = vadd.f32 %v291, %v368
    %370 = vdwg.mxu0
    %371 = vmatprep.subr.mxu0 0.0
    %372 = vmatpush1.msra.mxu0 %v236
    %373 = vmatprep.subr.mxu0 0.0
    %374 = vmatpush1.msra.mxu0 %v239
    %375 = vmatprep.subr.mxu0 0.0
    %376 = vmatpush1.msra.mxu0 %v242
    %377 = vmatprep.subr.mxu0 0.0
    %378 = vmatpush1.msra.mxu0 %v245
    %379 = vmatprep.subr.mxu0 0.0
    %380 = vmatpush1.msra.mxu0 %v248
    %381 = vmatprep.subr.mxu0 0.0
    %382 = vmatpush1.msra.mxu0 %v251
    %383 = vmatprep.subr.mxu0 0.0
    %384 = vmatpush1.msra.mxu0 %v254
    %385 = vmatprep.subr.mxu0 0.0
    %386 = vmatpush1.msra.mxu0 %v257
    %387 = vmatprep.subr.mxu0 0.0
    %388 = vmatpush1.msra.mxu0 %v260
    %389 = vmatprep.subr.mxu0 0.0
    %390 = vmatpush1.msra.mxu0 %v263
    %391 = vmatprep.subr.mxu0 0.0
    %392 = vmatpush1.msra.mxu0 %v266
    %393 = vmatprep.subr.mxu0 0.0
    %394 = vmatpush1.msra.mxu0 %v269
    %395 = vmatprep.subr.mxu0 0.0
    %396 = vmatpush1.msra.mxu0 %v272
    %397 = vmatprep.subr.mxu0 0.0
    %398 = vmatpush1.msra.mxu0 %v275
    %399 = vmatprep.subr.mxu0 0.0
    %400 = vmatpush1.msra.mxu0 %v278
    %401 = vmatprep.subr.mxu0 0.0
    %402 = vmatpush1.msra.mxu0 %v281
    %403 = vmatprep.subr.mxu0 0.0
    %404 = vmatpush1.msra.mxu0 0.0
    %405 = vmatprep.subr.mxu0 0.0
    %406 = vmatpush1.msra.mxu0 0.0
    %407 = vmatprep.subr.mxu0 0.0
    %408 = vmatpush1.msra.mxu0 0.0
    %409 = vmatprep.subr.mxu0 0.0
    %410 = vmatpush1.msra.mxu0 0.0
    %411 = vmatprep.subr.mxu0 0.0
    %412 = vmatpush1.msra.mxu0 0.0
    %413 = vmatprep.subr.mxu0 0.0
    %414 = vmatpush1.msra.mxu0 0.0
    %415 = vmatprep.subr.mxu0 0.0
    %416 = vmatpush1.msra.mxu0 0.0
    %417 = vmatprep.subr.mxu0 0.0
    %418 = vmatpush1.msra.mxu0 0.0
    %419 = vmatprep.subr.mxu0 0.0
    %420 = vmatpush1.msra.mxu0 0.0
    %421 = vmatprep.subr.mxu0 0.0
    %422 = vmatpush1.msra.mxu0 0.0
    %423 = vmatprep.subr.mxu0 0.0
    %424 = vmatpush1.msra.mxu0 0.0
    %425 = vmatprep.subr.mxu0 0.0
    %426 = vmatpush1.msra.mxu0 0.0
    %427 = vmatprep.subr.mxu0 0.0
    %428 = vmatpush1.msra.mxu0 0.0
    %429 = vmatprep.subr.mxu0 0.0
    %430 = vmatpush1.msra.mxu0 0.0
    %431 = vmatprep.subr.mxu0 0.0
    %432 = vmatpush1.msra.mxu0 0.0
    %433 = vmatprep.subr.mxu0 0.0
    %434 = vmatpush1.msra.mxu0 0.0
    %435 = vmatprep.mubr.f32.mxu0 0.0
    %436 = vmatmul.mubr.f32.gmra.mrb[0].mxu0 %v299
    %v437 = vpop.f32.mrb[0].mxu0
    %v438 = vadd.f32 %v295, %v437
    %v439 = vpop.f32.mrb[0].mxu0
    %440 = vdwg.mxu0
    %v442 = vrot.slane %v367, 2
    %v444 = vadd.f32 %v155, %v442
    %v445 = vxor.u32 %v444, 2147483648
    %v446 = vmul.f32 %v445, 1.442695
    %v447 = vpow.pop %v446
    %v448 = vadd.f32 %v447, 1.0
    %v449 = vrcp.pop %v448
    %v450 = vmul.f32 1.0, %v449
    %v452 = vrot.slane %v369, 2
    %v454 = vadd.f32 %v157, %v452
    %v455 = vxor.u32 %v454, 2147483648
    %v456 = vmul.f32 %v455, 1.442695
    %v457 = vpow.pop %v456
    %v458 = vadd.f32 %v457, 1.0
    %v459 = vrcp.pop %v458
    %v460 = vmul.f32 1.0, %v459
    %v462 = vrot.slane %v438, 2
    %v464 = vmul.f32 %v450, %v462
    %v465 = vadd.f32 %v231, %v464
    %v466 = vtanh.pop %v465
    %v467 = vsub.f32 1.0, %v460
    %v468 = vmul.f32 %v467, %v466
    %v470 = vrot.slane %v299, 2
    %v472 = vmul.f32 %v460, %v470
    %v473 = vadd.f32 %v468, %v472
    %v475 = vrot.slane %v473, 6
    %477 = vmatprep.subr.mxu0 %v235
    %478 = vmatpush1.msra.mxu0 %v234
    %479 = vmatprep.subr.mxu0 %v238
    %480 = vmatpush1.msra.mxu0 %v237
    %481 = vmatprep.subr.mxu0 %v241
    %482 = vmatpush1.msra.mxu0 %v240
    %483 = vmatprep.subr.mxu0 %v244
    %484 = vmatpush1.msra.mxu0 %v243
    %485 = vmatprep.subr.mxu0 %v247
    %486 = vmatpush1.msra.mxu0 %v246
    %487 = vmatprep.subr.mxu0 %v250
    %488 = vmatpush1.msra.mxu0 %v249
    %489 = vmatprep.subr.mxu0 %v253
    %490 = vmatpush1.msra.mxu0 %v252
    %491 = vmatprep.subr.mxu0 %v256
    %492 = vmatpush1.msra.mxu0 %v255
    %493 = vmatprep.subr.mxu0 %v259
    %494 = vmatpush1.msra.mxu0 %v258
    %495 = vmatprep.subr.mxu0 %v262
    %496 = vmatpush1.msra.mxu0 %v261
    %497 = vmatprep.subr.mxu0 %v265
    %498 = vmatpush1.msra.mxu0 %v264
    %499 = vmatprep.subr.mxu0 %v268
    %500 = vmatpush1.msra.mxu0 %v267
    %501 = vmatprep.subr.mxu0 %v271
    %502 = vmatpush1.msra.mxu0 %v270
    %503 = vmatprep.subr.mxu0 %v274
    %504 = vmatpush1.msra.mxu0 %v273
    %505 = vmatprep.subr.mxu0 %v277
    %506 = vmatpush1.msra.mxu0 %v276
    %507 = vmatprep.subr.mxu0 %v280
    %508 = vmatpush1.msra.mxu0 %v279
    %509 = vmatprep.subr.mxu0 0.0
    %510 = vmatpush1.msra.mxu0 0.0
    %511 = vmatprep.subr.mxu0 0.0
    %512 = vmatpush1.msra.mxu0 0.0
    %513 = vmatprep.subr.mxu0 0.0
    %514 = vmatpush1.msra.mxu0 0.0
    %515 = vmatprep.subr.mxu0 0.0
    %516 = vmatpush1.msra.mxu0 0.0
    %517 = vmatprep.subr.mxu0 0.0
    %518 = vmatpush1.msra.mxu0 0.0
    %519 = vmatprep.subr.mxu0 0.0
    %520 = vmatpush1.msra.mxu0 0.0
    %521 = vmatprep.subr.mxu0 0.0
    %522 = vmatpush1.msra.mxu0 0.0
    %523 = vmatprep.subr.mxu0 0.0
    %524 = vmatpush1.msra.mxu0 0.0
    %525 = vmatprep.subr.mxu0 0.0
    %526 = vmatpush1.msra.mxu0 0.0
    %527 = vmatprep.subr.mxu0 0.0
    %528 = vmatpush1.msra.mxu0 0.0
    %529 = vmatprep.subr.mxu0 0.0
    %530 = vmatpush1.msra.mxu0 0.0
    %531 = vmatprep.subr.mxu0 0.0
    %532 = vmatpush1.msra.mxu0 0.0
    %533 = vmatprep.subr.mxu0 0.0
    %534 = vmatpush1.msra.mxu0 0.0
    %535 = vmatprep.subr.mxu0 0.0
    %536 = vmatpush1.msra.mxu0 0.0
    %537 = vmatprep.subr.mxu0 0.0
    %538 = vmatpush1.msra.mxu0 0.0
    %539 = vmatprep.subr.mxu0 0.0
    %540 = vmatpush1.msra.mxu0 0.0
    %541 = vmatprep.mubr.f32.mxu0 0.0
    %542 = vmatmul.mubr.f32.gmra.mrb[0].mxu0 %v475
    %v543 = vpop.f32.mrb[0].mxu0
    %v544 = vadd.f32 %v287, %v543
    %v545 = vpop.f32.mrb[0].mxu0
    %v546 = vadd.f32 %v291, %v545
    %547 = vdwg.mxu0
    %548 = vmatprep.subr.mxu0 0.0
    %549 = vmatpush1.msra.mxu0 %v236
    %550 = vmatprep.subr.mxu0 0.0
    %551 = vmatpush1.msra.mxu0 %v239
    %552 = vmatprep.subr.mxu0 0.0
    %553 = vmatpush1.msra.mxu0 %v242
    %554 = vmatprep.subr.mxu0 0.0
    %555 = vmatpush1.msra.mxu0 %v245
    %556 = vmatprep.subr.mxu0 0.0
    %557 = vmatpush1.msra.mxu0 %v248
    %558 = vmatprep.subr.mxu0 0.0
    %559 = vmatpush1.msra.mxu0 %v251
    %560 = vmatprep.subr.mxu0 0.0
    %561 = vmatpush1.msra.mxu0 %v254
    %562 = vmatprep.subr.mxu0 0.0
    %563 = vmatpush1.msra.mxu0 %v257
    %564 = vmatprep.subr.mxu0 0.0
    %565 = vmatpush1.msra.mxu0 %v260
    %566 = vmatprep.subr.mxu0 0.0
    %567 = vmatpush1.msra.mxu0 %v263
    %568 = vmatprep.subr.mxu0 0.0
    %569 = vmatpush1.msra.mxu0 %v266
    %570 = vmatprep.subr.mxu0 0.0
    %571 = vmatpush1.msra.mxu0 %v269
    %572 = vmatprep.subr.mxu0 0.0
    %573 = vmatpush1.msra.mxu0 %v272
    %574 = vmatprep.subr.mxu0 0.0
    %575 = vmatpush1.msra.mxu0 %v275
    %576 = vmatprep.subr.mxu0 0.0
    %577 = vmatpush1.msra.mxu0 %v278
    %578 = vmatprep.subr.mxu0 0.0
    %579 = vmatpush1.msra.mxu0 %v281
    %580 = vmatprep.subr.mxu0 0.0
    %581 = vmatpush1.msra.mxu0 0.0
    %582 = vmatprep.subr.mxu0 0.0
    %583 = vmatpush1.msra.mxu0 0.0
    %584 = vmatprep.subr.mxu0 0.0
    %585 = vmatpush1.msra.mxu0 0.0
    %586 = vmatprep.subr.mxu0 0.0
    %587 = vmatpush1.msra.mxu0 0.0
    %588 = vmatprep.subr.mxu0 0.0
    %589 = vmatpush1.msra.mxu0 0.0
    %590 = vmatprep.subr.mxu0 0.0
    %591 = vmatpush1.msra.mxu0 0.0
    %592 = vmatprep.subr.mxu0 0.0
    %593 = vmatpush1.msra.mxu0 0.0
    %594 = vmatprep.subr.mxu0 0.0
    %595 = vmatpush1.msra.mxu0 0.0
    %596 = vmatprep.subr.mxu0 0.0
    %597 = vmatpush1.msra.mxu0 0.0
    %598 = vmatprep.subr.mxu0 0.0
    %599 = vmatpush1.msra.mxu0 0.0
    %600 = vmatprep.subr.mxu0 0.0
    %601 = vmatpush1.msra.mxu0 0.0
    %602 = vmatprep.subr.mxu0 0.0
    %603 = vmatpush1.msra.mxu0 0.0
    %604 = vmatprep.subr.mxu0 0.0
    %605 = vmatpush1.msra.mxu0 0.0
    %606 = vmatprep.subr.mxu0 0.0
    %607 = vmatpush1.msra.mxu0 0.0
    %608 = vmatprep.subr.mxu0 0.0
    %609 = vmatpush1.msra.mxu0 0.0
    %610 = vmatprep.subr.mxu0 0.0
    %611 = vmatpush1.msra.mxu0 0.0
    %612 = vmatprep.mubr.f32.mxu0 0.0
    %613 = vmatmul.mubr.f32.gmra.mrb[0].mxu0 %v475
    %v614 = vpop.f32.mrb[0].mxu0
    %v615 = vadd.f32 %v295, %v614
    %v616 = vpop.f32.mrb[0].mxu0
    %617 = vdwg.mxu0
    %v619 = vrot.slane %v544, 4
    %v621 = vadd.f32 %v155, %v619
    %v622 = vxor.u32 %v621, 2147483648
    %v623 = vmul.f32 %v622, 1.442695
    %v624 = vpow.pop %v623
    %v625 = vadd.f32 %v624, 1.0
    %v626 = vrcp.pop %v625
    %v627 = vmul.f32 1.0, %v626
    %v629 = vrot.slane %v546, 4
    %v631 = vadd.f32 %v157, %v629
    %v632 = vxor.u32 %v631, 2147483648
    %v633 = vmul.f32 %v632, 1.442695
    %v634 = vpow.pop %v633
    %v635 = vadd.f32 %v634, 1.0
    %v636 = vrcp.pop %v635
    %v637 = vmul.f32 1.0, %v636
    %v639 = vrot.slane %v615, 4
    %v641 = vmul.f32 %v627, %v639
    %v642 = vadd.f32 %v231, %v641
    %v643 = vtanh.pop %v642
    %v644 = vsub.f32 1.0, %v637
    %v645 = vmul.f32 %v644, %v643
    %v646 = vrot.slane %v473, 2
    %v648 = vmul.f32 %v637, %v646
    %v649 = vadd.f32 %v645, %v648
    %v651 = vrot.slane %v649, 4
    %653 = vmatprep.subr.mxu0 %v235
    %654 = vmatpush1.msra.mxu0 %v234
    %655 = vmatprep.subr.mxu0 %v238
    %656 = vmatpush1.msra.mxu0 %v237
    %657 = vmatprep.subr.mxu0 %v241
    %658 = vmatpush1.msra.mxu0 %v240
    %659 = vmatprep.subr.mxu0 %v244
    %660 = vmatpush1.msra.mxu0 %v243
    %661 = vmatprep.subr.mxu0 %v247
    %662 = vmatpush1.msra.mxu0 %v246
    %663 = vmatprep.subr.mxu0 %v250
    %664 = vmatpush1.msra.mxu0 %v249
    %665 = vmatprep.subr.mxu0 %v253
    %666 = vmatpush1.msra.mxu0 %v252
    %667 = vmatprep.subr.mxu0 %v256
    %668 = vmatpush1.msra.mxu0 %v255
    %669 = vmatprep.subr.mxu0 %v259
    %670 = vmatpush1.msra.mxu0 %v258
    %671 = vmatprep.subr.mxu0 %v262
    %672 = vmatpush1.msra.mxu0 %v261
    %673 = vmatprep.subr.mxu0 %v265
    %674 = vmatpush1.msra.mxu0 %v264
    %675 = vmatprep.subr.mxu0 %v268
    %676 = vmatpush1.msra.mxu0 %v267
    %677 = vmatprep.subr.mxu0 %v271
    %678 = vmatpush1.msra.mxu0 %v270
    %679 = vmatprep.subr.mxu0 %v274
    %680 = vmatpush1.msra.mxu0 %v273
    %681 = vmatprep.subr.mxu0 %v277
    %682 = vmatpush1.msra.mxu0 %v276
    %683 = vmatprep.subr.mxu0 %v280
    %684 = vmatpush1.msra.mxu0 %v279
    %685 = vmatprep.subr.mxu0 0.0
    %686 = vmatpush1.msra.mxu0 0.0
    %687 = vmatprep.subr.mxu0 0.0
    %688 = vmatpush1.msra.mxu0 0.0
    %689 = vmatprep.subr.mxu0 0.0
    %690 = vmatpush1.msra.mxu0 0.0
    %691 = vmatprep.subr.mxu0 0.0
    %692 = vmatpush1.msra.mxu0 0.0
    %693 = vmatprep.subr.mxu0 0.0
    %694 = vmatpush1.msra.mxu0 0.0
    %695 = vmatprep.subr.mxu0 0.0
    %696 = vmatpush1.msra.mxu0 0.0
    %697 = vmatprep.subr.mxu0 0.0
    %698 = vmatpush1.msra.mxu0 0.0
    %699 = vmatprep.subr.mxu0 0.0
    %700 = vmatpush1.msra.mxu0 0.0
    %701 = vmatprep.subr.mxu0 0.0
    %702 = vmatpush1.msra.mxu0 0.0
    %703 = vmatprep.subr.mxu0 0.0
    %704 = vmatpush1.msra.mxu0 0.0
    %705 = vmatprep.subr.mxu0 0.0
    %706 = vmatpush1.msra.mxu0 0.0
    %707 = vmatprep.subr.mxu0 0.0
    %708 = vmatpush1.msra.mxu0 0.0
    %709 = vmatprep.subr.mxu0 0.0
    %710 = vmatpush1.msra.mxu0 0.0
    %711 = vmatprep.subr.mxu0 0.0
    %712 = vmatpush1.msra.mxu0 0.0
    %713 = vmatprep.subr.mxu0 0.0
    %714 = vmatpush1.msra.mxu0 0.0
    %715 = vmatprep.subr.mxu0 0.0
    %716 = vmatpush1.msra.mxu0 0.0
    %717 = vmatprep.mubr.f32.mxu0 0.0
    %718 = vmatmul.mubr.f32.gmra.mrb[0].mxu0 %v651
    %v719 = vpop.f32.mrb[0].mxu0
    %v720 = vadd.f32 %v287, %v719
    %v721 = vpop.f32.mrb[0].mxu0
    %v722 = vadd.f32 %v291, %v721
    %723 = vdwg.mxu0
    %724 = vmatprep.subr.mxu0 0.0
    %725 = vmatpush1.msra.mxu0 %v236
    %726 = vmatprep.subr.mxu0 0.0
    %727 = vmatpush1.msra.mxu0 %v239
    %728 = vmatprep.subr.mxu0 0.0
    %729 = vmatpush1.msra.mxu0 %v242
    %730 = vmatprep.subr.mxu0 0.0
    %731 = vmatpush1.msra.mxu0 %v245
    %732 = vmatprep.subr.mxu0 0.0
    %733 = vmatpush1.msra.mxu0 %v248
    %734 = vmatprep.subr.mxu0 0.0
    %735 = vmatpush1.msra.mxu0 %v251
    %736 = vmatprep.subr.mxu0 0.0
    %737 = vmatpush1.msra.mxu0 %v254
    %738 = vmatprep.subr.mxu0 0.0
    %739 = vmatpush1.msra.mxu0 %v257
    %740 = vmatprep.subr.mxu0 0.0
    %741 = vmatpush1.msra.mxu0 %v260
    %742 = vmatprep.subr.mxu0 0.0
    %743 = vmatpush1.msra.mxu0 %v263
    %744 = vmatprep.subr.mxu0 0.0
    %745 = vmatpush1.msra.mxu0 %v266
    %746 = vmatprep.subr.mxu0 0.0
    %747 = vmatpush1.msra.mxu0 %v269
    %748 = vmatprep.subr.mxu0 0.0
    %749 = vmatpush1.msra.mxu0 %v272
    %750 = vmatprep.subr.mxu0 0.0
    %751 = vmatpush1.msra.mxu0 %v275
    %752 = vmatprep.subr.mxu0 0.0
    %753 = vmatpush1.msra.mxu0 %v278
    %754 = vmatprep.subr.mxu0 0.0
    %755 = vmatpush1.msra.mxu0 %v281
    %756 = vmatprep.subr.mxu0 0.0
    %757 = vmatpush1.msra.mxu0 0.0
    %758 = vmatprep.subr.mxu0 0.0
    %759 = vmatpush1.msra.mxu0 0.0
    %760 = vmatprep.subr.mxu0 0.0
    %761 = vmatpush1.msra.mxu0 0.0
    %762 = vmatprep.subr.mxu0 0.0
    %763 = vmatpush1.msra.mxu0 0.0
    %764 = vmatprep.subr.mxu0 0.0
    %765 = vmatpush1.msra.mxu0 0.0
    %766 = vmatprep.subr.mxu0 0.0
    %767 = vmatpush1.msra.mxu0 0.0
    %768 = vmatprep.subr.mxu0 0.0
    %769 = vmatpush1.msra.mxu0 0.0
    %770 = vmatprep.subr.mxu0 0.0
    %771 = vmatpush1.msra.mxu0 0.0
    %772 = vmatprep.subr.mxu0 0.0
    %773 = vmatpush1.msra.mxu0 0.0
    %774 = vmatprep.subr.mxu0 0.0
    %775 = vmatpush1.msra.mxu0 0.0
    %776 = vmatprep.subr.mxu0 0.0
    %777 = vmatpush1.msra.mxu0 0.0
    %778 = vmatprep.subr.mxu0 0.0
    %779 = vmatpush1.msra.mxu0 0.0
    %780 = vmatprep.subr.mxu0 0.0
    %781 = vmatpush1.msra.mxu0 0.0
    %782 = vmatprep.subr.mxu0 0.0
    %783 = vmatpush1.msra.mxu0 0.0
    %784 = vmatprep.subr.mxu0 0.0
    %785 = vmatpush1.msra.mxu0 0.0
    %786 = vmatprep.subr.mxu0 0.0
    %787 = vmatpush1.msra.mxu0 0.0
    %788 = vmatprep.mubr.f32.mxu0 0.0
    %789 = vmatmul.mubr.f32.gmra.mrb[0].mxu0 %v651
    %v790 = vpop.f32.mrb[0].mxu0
    %v791 = vadd.f32 %v295, %v790
    %v792 = vpop.f32.mrb[0].mxu0
    %793 = vdwg.mxu0
    %v795 = vrot.slane %v720, 6
    %v797 = vadd.f32 %v155, %v795
    %v798 = vxor.u32 %v797, 2147483648
    %v799 = vmul.f32 %v798, 1.442695
    %v800 = vpow.pop %v799
    %v801 = vadd.f32 %v800, 1.0
    %v802 = vrcp.pop %v801
    %v803 = vmul.f32 1.0, %v802
    %v805 = vrot.slane %v722, 6
    %v807 = vadd.f32 %v157, %v805
    %v808 = vxor.u32 %v807, 2147483648
    %v809 = vmul.f32 %v808, 1.442695
    %v810 = vpow.pop %v809
    %v811 = vadd.f32 %v810, 1.0
    %v812 = vrcp.pop %v811
    %v813 = vmul.f32 1.0, %v812
    %v815 = vrot.slane %v791, 6
    %v817 = vmul.f32 %v803, %v815
    %v818 = vadd.f32 %v231, %v817
    %v819 = vtanh.pop %v818
    %v820 = vsub.f32 1.0, %v813
    %v821 = vmul.f32 %v820, %v819
    %v822 = vrot.slane %v649, 2
    %v824 = vmul.f32 %v813, %v822
    %v825 = vadd.f32 %v821, %v824
    %v827 = vrot.slane %v825, 2
    %829 = vmatprep.subr.mxu0 %v235
    %830 = vmatpush1.msra.mxu0 %v234
    %831 = vmatprep.subr.mxu0 %v238
    %832 = vmatpush1.msra.mxu0 %v237
    %833 = vmatprep.subr.mxu0 %v241
    %834 = vmatpush1.msra.mxu0 %v240
    %835 = vmatprep.subr.mxu0 %v244
    %836 = vmatpush1.msra.mxu0 %v243
    %837 = vmatprep.subr.mxu0 %v247
    %838 = vmatpush1.msra.mxu0 %v246
    %839 = vmatprep.subr.mxu0 %v250
    %840 = vmatpush1.msra.mxu0 %v249
    %841 = vmatprep.subr.mxu0 %v253
    %842 = vmatpush1.msra.mxu0 %v252
    %843 = vmatprep.subr.mxu0 %v256
    %844 = vmatpush1.msra.mxu0 %v255
    %845 = vmatprep.subr.mxu0 %v259
    %846 = vmatpush1.msra.mxu0 %v258
    %847 = vmatprep.subr.mxu0 %v262
    %848 = vmatpush1.msra.mxu0 %v261
    %849 = vmatprep.subr.mxu0 %v265
    %850 = vmatpush1.msra.mxu0 %v264
    %851 = vmatprep.subr.mxu0 %v268
    %852 = vmatpush1.msra.mxu0 %v267
    %853 = vmatprep.subr.mxu0 %v271
    %854 = vmatpush1.msra.mxu0 %v270
    %855 = vmatprep.subr.mxu0 %v274
    %856 = vmatpush1.msra.mxu0 %v273
    %857 = vmatprep.subr.mxu0 %v277
    %858 = vmatpush1.msra.mxu0 %v276
    %859 = vmatprep.subr.mxu0 %v280
    %860 = vmatpush1.msra.mxu0 %v279
    %861 = vmatprep.subr.mxu0 0.0
    %862 = vmatpush1.msra.mxu0 0.0
    %863 = vmatprep.subr.mxu0 0.0
    %864 = vmatpush1.msra.mxu0 0.0
    %865 = vmatprep.subr.mxu0 0.0
    %866 = vmatpush1.msra.mxu0 0.0
    %867 = vmatprep.subr.mxu0 0.0
    %868 = vmatpush1.msra.mxu0 0.0
    %869 = vmatprep.subr.mxu0 0.0
    %870 = vmatpush1.msra.mxu0 0.0
    %871 = vmatprep.subr.mxu0 0.0
    %872 = vmatpush1.msra.mxu0 0.0
    %873 = vmatprep.subr.mxu0 0.0
    %874 = vmatpush1.msra.mxu0 0.0
    %875 = vmatprep.subr.mxu0 0.0
    %876 = vmatpush1.msra.mxu0 0.0
    %877 = vmatprep.subr.mxu0 0.0
    %878 = vmatpush1.msra.mxu0 0.0
    %879 = vmatprep.subr.mxu0 0.0
    %880 = vmatpush1.msra.mxu0 0.0
    %881 = vmatprep.subr.mxu0 0.0
    %882 = vmatpush1.msra.mxu0 0.0
    %883 = vmatprep.subr.mxu0 0.0
    %884 = vmatpush1.msra.mxu0 0.0
    %885 = vmatprep.subr.mxu0 0.0
    %886 = vmatpush1.msra.mxu0 0.0
    %887 = vmatprep.subr.mxu0 0.0
    %888 = vmatpush1.msra.mxu0 0.0
    %889 = vmatprep.subr.mxu0 0.0
    %890 = vmatpush1.msra.mxu0 0.0
    %891 = vmatprep.subr.mxu0 0.0
    %892 = vmatpush1.msra.mxu0 0.0
    %893 = vmatprep.mubr.f32.mxu0 0.0
    %894 = vmatmul.mubr.f32.gmra.mrb[0].mxu0 %v827
    %v895 = vpop.f32.mrb[0].mxu0
    %v896 = vadd.f32 %v287, %v895
    %v897 = vpop.f32.mrb[0].mxu0
    %v898 = vadd.f32 %v291, %v897
    %899 = vdwg.mxu0
    %900 = vmatprep.subr.mxu0 0.0
    %901 = vmatpush1.msra.mxu0 %v236
    %902 = vmatprep.subr.mxu0 0.0
    %903 = vmatpush1.msra.mxu0 %v239
    %904 = vmatprep.subr.mxu0 0.0
    %905 = vmatpush1.msra.mxu0 %v242
    %906 = vmatprep.subr.mxu0 0.0
    %907 = vmatpush1.msra.mxu0 %v245
    %908 = vmatprep.subr.mxu0 0.0
    %909 = vmatpush1.msra.mxu0 %v248
    %910 = vmatprep.subr.mxu0 0.0
    %911 = vmatpush1.msra.mxu0 %v251
    %912 = vmatprep.subr.mxu0 0.0
    %913 = vmatpush1.msra.mxu0 %v254
    %914 = vmatprep.subr.mxu0 0.0
    %915 = vmatpush1.msra.mxu0 %v257
    %916 = vmatprep.subr.mxu0 0.0
    %917 = vmatpush1.msra.mxu0 %v260
    %918 = vmatprep.subr.mxu0 0.0
    %919 = vmatpush1.msra.mxu0 %v263
    %920 = vmatprep.subr.mxu0 0.0
    %921 = vmatpush1.msra.mxu0 %v266
    %922 = vmatprep.subr.mxu0 0.0
    %923 = vmatpush1.msra.mxu0 %v269
    %924 = vmatprep.subr.mxu0 0.0
    %925 = vmatpush1.msra.mxu0 %v272
    %926 = vmatprep.subr.mxu0 0.0
    %927 = vmatpush1.msra.mxu0 %v275
    %928 = vmatprep.subr.mxu0 0.0
    %929 = vmatpush1.msra.mxu0 %v278
    %930 = vmatprep.subr.mxu0 0.0
    %931 = vmatpush1.msra.mxu0 %v281
    %932 = vmatprep.subr.mxu0 0.0
    %933 = vmatpush1.msra.mxu0 0.0
    %934 = vmatprep.subr.mxu0 0.0
    %935 = vmatpush1.msra.mxu0 0.0
    %936 = vmatprep.subr.mxu0 0.0
    %937 = vmatpush1.msra.mxu0 0.0
    %938 = vmatprep.subr.mxu0 0.0
    %939 = vmatpush1.msra.mxu0 0.0
    %940 = vmatprep.subr.mxu0 0.0
    %941 = vmatpush1.msra.mxu0 0.0
    %942 = vmatprep.subr.mxu0 0.0
    %943 = vmatpush1.msra.mxu0 0.0
    %944 = vmatprep.subr.mxu0 0.0
    %945 = vmatpush1.msra.mxu0 0.0
    %946 = vmatprep.subr.mxu0 0.0
    %947 = vmatpush1.msra.mxu0 0.0
    %948 = vmatprep.subr.mxu0 0.0
    %949 = vmatpush1.msra.mxu0 0.0
    %950 = vmatprep.subr.mxu0 0.0
    %951 = vmatpush1.msra.mxu0 0.0
    %952 = vmatprep.subr.mxu0 0.0
    %953 = vmatpush1.msra.mxu0 0.0
    %954 = vmatprep.subr.mxu0 0.0
    %955 = vmatpush1.msra.mxu0 0.0
    %956 = vmatprep.subr.mxu0 0.0
    %957 = vmatpush1.msra.mxu0 0.0
    %958 = vmatprep.subr.mxu0 0.0
    %959 = vmatpush1.msra.mxu0 0.0
    %960 = vmatprep.subr.mxu0 0.0
    %961 = vmatpush1.msra.mxu0 0.0
    %962 = vmatprep.subr.mxu0 0.0
    %963 = vmatpush1.msra.mxu0 0.0
    %964 = vmatprep.mubr.f32.mxu0 0.0
    %965 = vmatmul.mubr.f32.gmra.mrb[0].mxu0 %v827
    %v966 = vpop.f32.mrb[0].mxu0
    %v967 = vadd.f32 %v295, %v966
    %v968 = vpop.f32.mrb[0].mxu0
    %969 = vdwg.mxu0
    %v970 = vadd.f32 %v155, %v896
    %v971 = vxor.u32 %v970, 2147483648
    %v972 = vmul.f32 %v971, 1.442695
    %v973 = vpow.pop %v972
    %v974 = vadd.f32 %v973, 1.0
    %v975 = vrcp.pop %v974
    %v976 = vmul.f32 1.0, %v975
    %v977 = vadd.f32 %v157, %v898
    %v978 = vxor.u32 %v977, 2147483648
    %v979 = vmul.f32 %v978, 1.442695
    %v980 = vpow.pop %v979
    %v981 = vadd.f32 %v980, 1.0
    %v982 = vrcp.pop %v981
    %v983 = vmul.f32 1.0, %v982
    %v984 = vmul.f32 %v976, %v967
    %v985 = vadd.f32 %v231, %v984
    %v986 = vtanh.pop %v985
    %v987 = vsub.f32 1.0, %v983
    %v988 = vmul.f32 %v987, %v986
    %v989 = vmul.f32 %v983, %v827
    %v990 = vadd.f32 %v988, %v989
    %991 = vmatprep.subr.mxu0 %v235
    %992 = vmatpush1.msra.mxu0 %v234
    %993 = vmatprep.subr.mxu0 %v238
    %994 = vmatpush1.msra.mxu0 %v237
    %995 = vmatprep.subr.mxu0 %v241
    %996 = vmatpush1.msra.mxu0 %v240
    %997 = vmatprep.subr.mxu0 %v244
    %998 = vmatpush1.msra.mxu0 %v243
    %999 = vmatprep.subr.mxu0 %v247
    %1000 = vmatpush1.msra.mxu0 %v246
    %1001 = vmatprep.subr.mxu0 %v250
    %1002 = vmatpush1.msra.mxu0 %v249
    %1003 = vmatprep.subr.mxu0 %v253
    %1004 = vmatpush1.msra.mxu0 %v252
    %1005 = vmatprep.subr.mxu0 %v256
    %1006 = vmatpush1.msra.mxu0 %v255
    %1007 = vmatprep.subr.mxu0 %v259
    %1008 = vmatpush1.msra.mxu0 %v258
    %1009 = vmatprep.subr.mxu0 %v262
    %1010 = vmatpush1.msra.mxu0 %v261
    %1011 = vmatprep.subr.mxu0 %v265
    %1012 = vmatpush1.msra.mxu0 %v264
    %1013 = vmatprep.subr.mxu0 %v268
    %1014 = vmatpush1.msra.mxu0 %v267
    %1015 = vmatprep.subr.mxu0 %v271
    %1016 = vmatpush1.msra.mxu0 %v270
    %1017 = vmatprep.subr.mxu0 %v274
    %1018 = vmatpush1.msra.mxu0 %v273
    %1019 = vmatprep.subr.mxu0 %v277
    %1020 = vmatpush1.msra.mxu0 %v276
    %1021 = vmatprep.subr.mxu0 %v280
    %1022 = vmatpush1.msra.mxu0 %v279
    %1023 = vmatprep.subr.mxu0 0.0
    %1024 = vmatpush1.msra.mxu0 0.0
    %1025 = vmatprep.subr.mxu0 0.0
    %1026 = vmatpush1.msra.mxu0 0.0
    %1027 = vmatprep.subr.mxu0 0.0
    %1028 = vmatpush1.msra.mxu0 0.0
    %1029 = vmatprep.subr.mxu0 0.0
    %1030 = vmatpush1.msra.mxu0 0.0
    %1031 = vmatprep.subr.mxu0 0.0
    %1032 = vmatpush1.msra.mxu0 0.0
    %1033 = vmatprep.subr.mxu0 0.0
    %1034 = vmatpush1.msra.mxu0 0.0
    %1035 = vmatprep.subr.mxu0 0.0
    %1036 = vmatpush1.msra.mxu0 0.0
    %1037 = vmatprep.subr.mxu0 0.0
    %1038 = vmatpush1.msra.mxu0 0.0
    %1039 = vmatprep.subr.mxu0 0.0
    %1040 = vmatpush1.msra.mxu0 0.0
    %1041 = vmatprep.subr.mxu0 0.0
    %1042 = vmatpush1.msra.mxu0 0.0
    %1043 = vmatprep.subr.mxu0 0.0
    %1044 = vmatpush1.msra.mxu0 0.0
    %1045 = vmatprep.subr.mxu0 0.0
    %1046 = vmatpush1.msra.mxu0 0.0
    %1047 = vmatprep.subr.mxu0 0.0
    %1048 = vmatpush1.msra.mxu0 0.0
    %1049 = vmatprep.subr.mxu0 0.0
    %1050 = vmatpush1.msra.mxu0 0.0
    %1051 = vmatprep.subr.mxu0 0.0
    %1052 = vmatpush1.msra.mxu0 0.0
    %1053 = vmatprep.subr.mxu0 0.0
    %1054 = vmatpush1.msra.mxu0 0.0
    %1055 = vmatprep.mubr.f32.mxu0 0.0
    %1056 = vmatmul.mubr.f32.gmra.mrb[0].mxu0 %v990
    %v1057 = vpop.f32.mrb[0].mxu0
    %v1058 = vadd.f32 %v287, %v1057
    %v1059 = vpop.f32.mrb[0].mxu0
    %v1060 = vadd.f32 %v291, %v1059
    %1061 = vdwg.mxu0
    %1062 = vmatprep.subr.mxu0 0.0
    %1063 = vmatpush1.msra.mxu0 %v236
    %1064 = vmatprep.subr.mxu0 0.0
    %1065 = vmatpush1.msra.mxu0 %v239
    %1066 = vmatprep.subr.mxu0 0.0
    %1067 = vmatpush1.msra.mxu0 %v242
    %1068 = vmatprep.subr.mxu0 0.0
    %1069 = vmatpush1.msra.mxu0 %v245
    %1070 = vmatprep.subr.mxu0 0.0
    %1071 = vmatpush1.msra.mxu0 %v248
    %1072 = vmatprep.subr.mxu0 0.0
    %1073 = vmatpush1.msra.mxu0 %v251
    %1074 = vmatprep.subr.mxu0 0.0
    %1075 = vmatpush1.msra.mxu0 %v254
    %1076 = vmatprep.subr.mxu0 0.0
    %1077 = vmatpush1.msra.mxu0 %v257
    %1078 = vmatprep.subr.mxu0 0.0
    %1079 = vmatpush1.msra.mxu0 %v260
    %1080 = vmatprep.subr.mxu0 0.0
    %1081 = vmatpush1.msra.mxu0 %v263
    %1082 = vmatprep.subr.mxu0 0.0
    %1083 = vmatpush1.msra.mxu0 %v266
    %1084 = vmatprep.subr.mxu0 0.0
    %1085 = vmatpush1.msra.mxu0 %v269
    %1086 = vmatprep.subr.mxu0 0.0
    %1087 = vmatpush1.msra.mxu0 %v272
    %1088 = vmatprep.subr.mxu0 0.0
    %1089 = vmatpush1.msra.mxu0 %v275
    %1090 = vmatprep.subr.mxu0 0.0
    %1091 = vmatpush1.msra.mxu0 %v278
    %1092 = vmatprep.subr.mxu0 0.0
    %1093 = vmatpush1.msra.mxu0 %v281
    %1094 = vmatprep.subr.mxu0 0.0
    %1095 = vmatpush1.msra.mxu0 0.0
    %1096 = vmatprep.subr.mxu0 0.0
    %1097 = vmatpush1.msra.mxu0 0.0
    %1098 = vmatprep.subr.mxu0 0.0
    %1099 = vmatpush1.msra.mxu0 0.0
    %1100 = vmatprep.subr.mxu0 0.0
    %1101 = vmatpush1.msra.mxu0 0.0
    %1102 = vmatprep.subr.mxu0 0.0
    %1103 = vmatpush1.msra.mxu0 0.0
    %1104 = vmatprep.subr.mxu0 0.0
    %1105 = vmatpush1.msra.mxu0 0.0
    %1106 = vmatprep.subr.mxu0 0.0
    %1107 = vmatpush1.msra.mxu0 0.0
    %1108 = vmatprep.subr.mxu0 0.0
    %1109 = vmatpush1.msra.mxu0 0.0
    %1110 = vmatprep.subr.mxu0 0.0
    %1111 = vmatpush1.msra.mxu0 0.0
    %1112 = vmatprep.subr.mxu0 0.0
    %1113 = vmatpush1.msra.mxu0 0.0
    %1114 = vmatprep.subr.mxu0 0.0
    %1115 = vmatpush1.msra.mxu0 0.0
    %1116 = vmatprep.subr.mxu0 0.0
    %1117 = vmatpush1.msra.mxu0 0.0
    %1118 = vmatprep.subr.mxu0 0.0
    %1119 = vmatpush1.msra.mxu0 0.0
    %1120 = vmatprep.subr.mxu0 0.0
    %1121 = vmatpush1.msra.mxu0 0.0
    %1122 = vmatprep.subr.mxu0 0.0
    %1123 = vmatpush1.msra.mxu0 0.0
    %1124 = vmatprep.subr.mxu0 0.0
    %1125 = vmatpush1.msra.mxu0 0.0
    %1126 = vmatprep.mubr.f32.mxu0 0.0
    %1127 = vmatmul.mubr.f32.gmra.mrb[0].mxu0 %v990
    %v1128 = vpop.f32.mrb[0].mxu0
    %v1129 = vadd.f32 %v295, %v1128
    %v1130 = vpop.f32.mrb[0].mxu0
    %1131 = vdwg.mxu0
    %v1133 = vrot.slane %v1058, 2
    %v1135 = vadd.f32 %v149, %v1133
    %v1136 = vxor.u32 %v1135, 2147483648
    %v1137 = vmul.f32 %v1136, 1.442695
    %v1138 = vpow.pop %v1137
    %v1139 = vadd.f32 %v1138, 1.0
    %v1140 = vrcp.pop %v1139
    %v1141 = vmul.f32 1.0, %v1140
    %v1143 = vrot.slane %v1060, 2
    %v1145 = vadd.f32 %v151, %v1143
    %v1146 = vxor.u32 %v1145, 2147483648
    %v1147 = vmul.f32 %v1146, 1.442695
    %v1148 = vpow.pop %v1147
    %v1149 = vadd.f32 %v1148, 1.0
    %v1150 = vrcp.pop %v1149
    %v1151 = vmul.f32 1.0, %v1150
    %v1153 = vrot.slane %v1129, 2
    %v1155 = vmul.f32 %v1141, %v1153
    %v1156 = vadd.f32 %v226, %v1155
    %v1157 = vtanh.pop %v1156
    %v1158 = vsub.f32 1.0, %v1151
    %v1159 = vmul.f32 %v1158, %v1157
    %v1161 = vrot.slane %v990, 2
    %v1163 = vmul.f32 %v1151, %v1161
    %v1164 = vadd.f32 %v1159, %v1163
    %v1166 = vrot.slane %v1164, 6
    %1168 = vmatprep.subr.mxu0 %v235
    %1169 = vmatpush1.msra.mxu0 %v234
    %1170 = vmatprep.subr.mxu0 %v238
    %1171 = vmatpush1.msra.mxu0 %v237
    %1172 = vmatprep.subr.mxu0 %v241
    %1173 = vmatpush1.msra.mxu0 %v240
    %1174 = vmatprep.subr.mxu0 %v244
    %1175 = vmatpush1.msra.mxu0 %v243
    %1176 = vmatprep.subr.mxu0 %v247
    %1177 = vmatpush1.msra.mxu0 %v246
    %1178 = vmatprep.subr.mxu0 %v250
    %1179 = vmatpush1.msra.mxu0 %v249
    %1180 = vmatprep.subr.mxu0 %v253
    %1181 = vmatpush1.msra.mxu0 %v252
    %1182 = vmatprep.subr.mxu0 %v256
    %1183 = vmatpush1.msra.mxu0 %v255
    %1184 = vmatprep.subr.mxu0 %v259
    %1185 = vmatpush1.msra.mxu0 %v258
    %1186 = vmatprep.subr.mxu0 %v262
    %1187 = vmatpush1.msra.mxu0 %v261
    %1188 = vmatprep.subr.mxu0 %v265
    %1189 = vmatpush1.msra.mxu0 %v264
    %1190 = vmatprep.subr.mxu0 %v268
    %1191 = vmatpush1.msra.mxu0 %v267
    %1192 = vmatprep.subr.mxu0 %v271
    %1193 = vmatpush1.msra.mxu0 %v270
    %1194 = vmatprep.subr.mxu0 %v274
    %1195 = vmatpush1.msra.mxu0 %v273
    %1196 = vmatprep.subr.mxu0 %v277
    %1197 = vmatpush1.msra.mxu0 %v276
    %1198 = vmatprep.subr.mxu0 %v280
    %1199 = vmatpush1.msra.mxu0 %v279
    %1200 = vmatprep.subr.mxu0 0.0
    %1201 = vmatpush1.msra.mxu0 0.0
    %1202 = vmatprep.subr.mxu0 0.0
    %1203 = vmatpush1.msra.mxu0 0.0
    %1204 = vmatprep.subr.mxu0 0.0
    %1205 = vmatpush1.msra.mxu0 0.0
    %1206 = vmatprep.subr.mxu0 0.0
    %1207 = vmatpush1.msra.mxu0 0.0
    %1208 = vmatprep.subr.mxu0 0.0
    %1209 = vmatpush1.msra.mxu0 0.0
    %1210 = vmatprep.subr.mxu0 0.0
    %1211 = vmatpush1.msra.mxu0 0.0
    %1212 = vmatprep.subr.mxu0 0.0
    %1213 = vmatpush1.msra.mxu0 0.0
    %1214 = vmatprep.subr.mxu0 0.0
    %1215 = vmatpush1.msra.mxu0 0.0
    %1216 = vmatprep.subr.mxu0 0.0
    %1217 = vmatpush1.msra.mxu0 0.0
    %1218 = vmatprep.subr.mxu0 0.0
    %1219 = vmatpush1.msra.mxu0 0.0
    %1220 = vmatprep.subr.mxu0 0.0
    %1221 = vmatpush1.msra.mxu0 0.0
    %1222 = vmatprep.subr.mxu0 0.0
    %1223 = vmatpush1.msra.mxu0 0.0
    %1224 = vmatprep.subr.mxu0 0.0
    %1225 = vmatpush1.msra.mxu0 0.0
    %1226 = vmatprep.subr.mxu0 0.0
    %1227 = vmatpush1.msra.mxu0 0.0
    %1228 = vmatprep.subr.mxu0 0.0
    %1229 = vmatpush1.msra.mxu0 0.0
    %1230 = vmatprep.subr.mxu0 0.0
    %1231 = vmatpush1.msra.mxu0 0.0
    %1232 = vmatprep.mubr.f32.mxu0 0.0
    %1233 = vmatmul.mubr.f32.gmra.mrb[0].mxu0 %v1166
    %v1234 = vpop.f32.mrb[0].mxu0
    %v1235 = vadd.f32 %v287, %v1234
    %v1236 = vpop.f32.mrb[0].mxu0
    %v1237 = vadd.f32 %v291, %v1236
    %1238 = vdwg.mxu0
    %1239 = vmatprep.subr.mxu0 0.0
    %1240 = vmatpush1.msra.mxu0 %v236
    %1241 = vmatprep.subr.mxu0 0.0
    %1242 = vmatpush1.msra.mxu0 %v239
    %1243 = vmatprep.subr.mxu0 0.0
    %1244 = vmatpush1.msra.mxu0 %v242
    %1245 = vmatprep.subr.mxu0 0.0
    %1246 = vmatpush1.msra.mxu0 %v245
    %1247 = vmatprep.subr.mxu0 0.0
    %1248 = vmatpush1.msra.mxu0 %v248
    %1249 = vmatprep.subr.mxu0 0.0
    %1250 = vmatpush1.msra.mxu0 %v251
    %1251 = vmatprep.subr.mxu0 0.0
    %1252 = vmatpush1.msra.mxu0 %v254
    %1253 = vmatprep.subr.mxu0 0.0
    %1254 = vmatpush1.msra.mxu0 %v257
    %1255 = vmatprep.subr.mxu0 0.0
    %1256 = vmatpush1.msra.mxu0 %v260
    %1257 = vmatprep.subr.mxu0 0.0
    %1258 = vmatpush1.msra.mxu0 %v263
    %1259 = vmatprep.subr.mxu0 0.0
    %1260 = vmatpush1.msra.mxu0 %v266
    %1261 = vmatprep.subr.mxu0 0.0
    %1262 = vmatpush1.msra.mxu0 %v269
    %1263 = vmatprep.subr.mxu0 0.0
    %1264 = vmatpush1.msra.mxu0 %v272
    %1265 = vmatprep.subr.mxu0 0.0
    %1266 = vmatpush1.msra.mxu0 %v275
    %1267 = vmatprep.subr.mxu0 0.0
    %1268 = vmatpush1.msra.mxu0 %v278
    %1269 = vmatprep.subr.mxu0 0.0
    %1270 = vmatpush1.msra.mxu0 %v281
    %1271 = vmatprep.subr.mxu0 0.0
    %1272 = vmatpush1.msra.mxu0 0.0
    %1273 = vmatprep.subr.mxu0 0.0
    %1274 = vmatpush1.msra.mxu0 0.0
    %1275 = vmatprep.subr.mxu0 0.0
    %1276 = vmatpush1.msra.mxu0 0.0
    %1277 = vmatprep.subr.mxu0 0.0
    %1278 = vmatpush1.msra.mxu0 0.0
    %1279 = vmatprep.subr.mxu0 0.0
    %1280 = vmatpush1.msra.mxu0 0.0
    %1281 = vmatprep.subr.mxu0 0.0
    %1282 = vmatpush1.msra.mxu0 0.0
    %1283 = vmatprep.subr.mxu0 0.0
    %1284 = vmatpush1.msra.mxu0 0.0
    %1285 = vmatprep.subr.mxu0 0.0
    %1286 = vmatpush1.msra.mxu0 0.0
    %1287 = vmatprep.subr.mxu0 0.0
    %1288 = vmatpush1.msra.mxu0 0.0
    %1289 = vmatprep.subr.mxu0 0.0
    %1290 = vmatpush1.msra.mxu0 0.0
    %1291 = vmatprep.subr.mxu0 0.0
    %1292 = vmatpush1.msra.mxu0 0.0
    %1293 = vmatprep.subr.mxu0 0.0
    %1294 = vmatpush1.msra.mxu0 0.0
    %1295 = vmatprep.subr.mxu0 0.0
    %1296 = vmatpush1.msra.mxu0 0.0
    %1297 = vmatprep.subr.mxu0 0.0
    %1298 = vmatpush1.msra.mxu0 0.0
    %1299 = vmatprep.subr.mxu0 0.0
    %1300 = vmatpush1.msra.mxu0 0.0
    %1301 = vmatprep.subr.mxu0 0.0
    %1302 = vmatpush1.msra.mxu0 0.0
    %1303 = vmatprep.mubr.f32.mxu0 0.0
    %1304 = vmatmul.mubr.f32.gmra.mrb[0].mxu0 %v1166
    %v1305 = vpop.f32.mrb[0].mxu0
    %v1306 = vadd.f32 %v295, %v1305
    %v1307 = vpop.f32.mrb[0].mxu0
    %1308 = vdwg.mxu0
    %v1310 = vrot.slane %v1235, 4
    %v1312 = vadd.f32 %v149, %v1310
    %v1313 = vxor.u32 %v1312, 2147483648
    %v1314 = vmul.f32 %v1313, 1.442695
    %v1315 = vpow.pop %v1314
    %v1316 = vadd.f32 %v1315, 1.0
    %v1317 = vrcp.pop %v1316
    %v1318 = vmul.f32 1.0, %v1317
    %v1320 = vrot.slane %v1237, 4
    %v1322 = vadd.f32 %v151, %v1320
    %v1323 = vxor.u32 %v1322, 2147483648
    %v1324 = vmul.f32 %v1323, 1.442695
    %v1325 = vpow.pop %v1324
    %v1326 = vadd.f32 %v1325, 1.0
    %v1327 = vrcp.pop %v1326
    %v1328 = vmul.f32 1.0, %v1327
    %v1330 = vrot.slane %v1306, 4
    %v1332 = vmul.f32 %v1318, %v1330
    %v1333 = vadd.f32 %v226, %v1332
    %v1334 = vtanh.pop %v1333
    %v1335 = vsub.f32 1.0, %v1328
    %v1336 = vmul.f32 %v1335, %v1334
    %v1337 = vrot.slane %v1164, 2
    %v1339 = vmul.f32 %v1328, %v1337
    %v1340 = vadd.f32 %v1336, %v1339
    %v1342 = vrot.slane %v1340, 4
    %1344 = vmatprep.subr.mxu0 %v235
    %1345 = vmatpush1.msra.mxu0 %v234
    %1346 = vmatprep.subr.mxu0 %v238
    %1347 = vmatpush1.msra.mxu0 %v237
    %1348 = vmatprep.subr.mxu0 %v241
    %1349 = vmatpush1.msra.mxu0 %v240
    %1350 = vmatprep.subr.mxu0 %v244
    %1351 = vmatpush1.msra.mxu0 %v243
    %1352 = vmatprep.subr.mxu0 %v247
    %1353 = vmatpush1.msra.mxu0 %v246
    %1354 = vmatprep.subr.mxu0 %v250
    %1355 = vmatpush1.msra.mxu0 %v249
    %1356 = vmatprep.subr.mxu0 %v253
    %1357 = vmatpush1.msra.mxu0 %v252
    %1358 = vmatprep.subr.mxu0 %v256
    %1359 = vmatpush1.msra.mxu0 %v255
    %1360 = vmatprep.subr.mxu0 %v259
    %1361 = vmatpush1.msra.mxu0 %v258
    %1362 = vmatprep.subr.mxu0 %v262
    %1363 = vmatpush1.msra.mxu0 %v261
    %1364 = vmatprep.subr.mxu0 %v265
    %1365 = vmatpush1.msra.mxu0 %v264
    %1366 = vmatprep.subr.mxu0 %v268
    %1367 = vmatpush1.msra.mxu0 %v267
    %1368 = vmatprep.subr.mxu0 %v271
    %1369 = vmatpush1.msra.mxu0 %v270
    %1370 = vmatprep.subr.mxu0 %v274
    %1371 = vmatpush1.msra.mxu0 %v273
    %1372 = vmatprep.subr.mxu0 %v277
    %1373 = vmatpush1.msra.mxu0 %v276
    %1374 = vmatprep.subr.mxu0 %v280
    %1375 = vmatpush1.msra.mxu0 %v279
    %1376 = vmatprep.subr.mxu0 0.0
    %1377 = vmatpush1.msra.mxu0 0.0
    %1378 = vmatprep.subr.mxu0 0.0
    %1379 = vmatpush1.msra.mxu0 0.0
    %1380 = vmatprep.subr.mxu0 0.0
    %1381 = vmatpush1.msra.mxu0 0.0
    %1382 = vmatprep.subr.mxu0 0.0
    %1383 = vmatpush1.msra.mxu0 0.0
    %1384 = vmatprep.subr.mxu0 0.0
    %1385 = vmatpush1.msra.mxu0 0.0
    %1386 = vmatprep.subr.mxu0 0.0
    %1387 = vmatpush1.msra.mxu0 0.0
    %1388 = vmatprep.subr.mxu0 0.0
    %1389 = vmatpush1.msra.mxu0 0.0
    %1390 = vmatprep.subr.mxu0 0.0
    %1391 = vmatpush1.msra.mxu0 0.0
    %1392 = vmatprep.subr.mxu0 0.0
    %1393 = vmatpush1.msra.mxu0 0.0
    %1394 = vmatprep.subr.mxu0 0.0
    %1395 = vmatpush1.msra.mxu0 0.0
    %1396 = vmatprep.subr.mxu0 0.0
    %1397 = vmatpush1.msra.mxu0 0.0
    %1398 = vmatprep.subr.mxu0 0.0
    %1399 = vmatpush1.msra.mxu0 0.0
    %1400 = vmatprep.subr.mxu0 0.0
    %1401 = vmatpush1.msra.mxu0 0.0
    %1402 = vmatprep.subr.mxu0 0.0
    %1403 = vmatpush1.msra.mxu0 0.0
    %1404 = vmatprep.subr.mxu0 0.0
    %1405 = vmatpush1.msra.mxu0 0.0
    %1406 = vmatprep.subr.mxu0 0.0
    %1407 = vmatpush1.msra.mxu0 0.0
    %1408 = vmatprep.mubr.f32.mxu0 0.0
    %1409 = vmatmul.mubr.f32.gmra.mrb[0].mxu0 %v1342
    %v1410 = vpop.f32.mrb[0].mxu0
    %v1411 = vadd.f32 %v287, %v1410
    %v1412 = vpop.f32.mrb[0].mxu0
    %v1413 = vadd.f32 %v291, %v1412
    %1414 = vdwg.mxu0
    %1415 = vmatprep.subr.mxu0 0.0
    %1416 = vmatpush1.msra.mxu0 %v236
    %1417 = vmatprep.subr.mxu0 0.0
    %1418 = vmatpush1.msra.mxu0 %v239
    %1419 = vmatprep.subr.mxu0 0.0
    %1420 = vmatpush1.msra.mxu0 %v242
    %1421 = vmatprep.subr.mxu0 0.0
    %1422 = vmatpush1.msra.mxu0 %v245
    %1423 = vmatprep.subr.mxu0 0.0
    %1424 = vmatpush1.msra.mxu0 %v248
    %1425 = vmatprep.subr.mxu0 0.0
    %1426 = vmatpush1.msra.mxu0 %v251
    %1427 = vmatprep.subr.mxu0 0.0
    %1428 = vmatpush1.msra.mxu0 %v254
    %1429 = vmatprep.subr.mxu0 0.0
    %1430 = vmatpush1.msra.mxu0 %v257
    %1431 = vmatprep.subr.mxu0 0.0
    %1432 = vmatpush1.msra.mxu0 %v260
    %1433 = vmatprep.subr.mxu0 0.0
    %1434 = vmatpush1.msra.mxu0 %v263
    %1435 = vmatprep.subr.mxu0 0.0
    %1436 = vmatpush1.msra.mxu0 %v266
    %1437 = vmatprep.subr.mxu0 0.0
    %1438 = vmatpush1.msra.mxu0 %v269
    %1439 = vmatprep.subr.mxu0 0.0
    %1440 = vmatpush1.msra.mxu0 %v272
    %1441 = vmatprep.subr.mxu0 0.0
    %1442 = vmatpush1.msra.mxu0 %v275
    %1443 = vmatprep.subr.mxu0 0.0
    %1444 = vmatpush1.msra.mxu0 %v278
    %1445 = vmatprep.subr.mxu0 0.0
    %1446 = vmatpush1.msra.mxu0 %v281
    %1447 = vmatprep.subr.mxu0 0.0
    %1448 = vmatpush1.msra.mxu0 0.0
    %1449 = vmatprep.subr.mxu0 0.0
    %1450 = vmatpush1.msra.mxu0 0.0
    %1451 = vmatprep.subr.mxu0 0.0
    %1452 = vmatpush1.msra.mxu0 0.0
    %1453 = vmatprep.subr.mxu0 0.0
    %1454 = vmatpush1.msra.mxu0 0.0
    %1455 = vmatprep.subr.mxu0 0.0
    %1456 = vmatpush1.msra.mxu0 0.0
    %1457 = vmatprep.subr.mxu0 0.0
    %1458 = vmatpush1.msra.mxu0 0.0
    %1459 = vmatprep.subr.mxu0 0.0
    %1460 = vmatpush1.msra.mxu0 0.0
    %1461 = vmatprep.subr.mxu0 0.0
    %1462 = vmatpush1.msra.mxu0 0.0
    %1463 = vmatprep.subr.mxu0 0.0
    %1464 = vmatpush1.msra.mxu0 0.0
    %1465 = vmatprep.subr.mxu0 0.0
    %1466 = vmatpush1.msra.mxu0 0.0
    %1467 = vmatprep.subr.mxu0 0.0
    %1468 = vmatpush1.msra.mxu0 0.0
    %1469 = vmatprep.subr.mxu0 0.0
    %1470 = vmatpush1.msra.mxu0 0.0
    %1471 = vmatprep.subr.mxu0 0.0
    %1472 = vmatpush1.msra.mxu0 0.0
    %1473 = vmatprep.subr.mxu0 0.0
    %1474 = vmatpush1.msra.mxu0 0.0
    %1475 = vmatprep.subr.mxu0 0.0
    %1476 = vmatpush1.msra.mxu0 0.0
    %1477 = vmatprep.subr.mxu0 0.0
    %1478 = vmatpush1.msra.mxu0 0.0
    %1479 = vmatprep.mubr.f32.mxu0 0.0
    %1480 = vmatmul.mubr.f32.gmra.mrb[0].mxu0 %v1342
    %v1481 = vpop.f32.mrb[0].mxu0
    %v1482 = vadd.f32 %v295, %v1481
    %v1483 = vpop.f32.mrb[0].mxu0
    %1484 = vdwg.mxu0
    %v1486 = vrot.slane %v1411, 6
    %v1488 = vadd.f32 %v149, %v1486
    %v1489 = vxor.u32 %v1488, 2147483648
    %v1490 = vmul.f32 %v1489, 1.442695
    %v1491 = vpow.pop %v1490
    %v1492 = vadd.f32 %v1491, 1.0
    %v1493 = vrcp.pop %v1492
    %v1494 = vmul.f32 1.0, %v1493
    %v1496 = vrot.slane %v1413, 6
    %v1498 = vadd.f32 %v151, %v1496
    %v1499 = vxor.u32 %v1498, 2147483648
    %v1500 = vmul.f32 %v1499, 1.442695
    %v1501 = vpow.pop %v1500
    %v1502 = vadd.f32 %v1501, 1.0
    %v1503 = vrcp.pop %v1502
    %v1504 = vmul.f32 1.0, %v1503
    %v1506 = vrot.slane %v1482, 6
    %v1508 = vmul.f32 %v1494, %v1506
    %v1509 = vadd.f32 %v226, %v1508
    %v1510 = vtanh.pop %v1509
    %v1511 = vsub.f32 1.0, %v1504
    %v1512 = vmul.f32 %v1511, %v1510
    %v1513 = vrot.slane %v1340, 2
    %v1515 = vmul.f32 %v1504, %v1513
    %v1516 = vadd.f32 %v1512, %v1515
    %v1518 = vrot.slane %v1516, 2
    %1520 = vmatprep.subr.mxu0 %v235
    %1521 = vmatpush1.msra.mxu0 %v234
    %1522 = vmatprep.subr.mxu0 %v238
    %1523 = vmatpush1.msra.mxu0 %v237
    %1524 = vmatprep.subr.mxu0 %v241
    %1525 = vmatpush1.msra.mxu0 %v240
    %1526 = vmatprep.subr.mxu0 %v244
    %1527 = vmatpush1.msra.mxu0 %v243
    %1528 = vmatprep.subr.mxu0 %v247
    %1529 = vmatpush1.msra.mxu0 %v246
    %1530 = vmatprep.subr.mxu0 %v250
    %1531 = vmatpush1.msra.mxu0 %v249
    %1532 = vmatprep.subr.mxu0 %v253
    %1533 = vmatpush1.msra.mxu0 %v252
    %1534 = vmatprep.subr.mxu0 %v256
    %1535 = vmatpush1.msra.mxu0 %v255
    %1536 = vmatprep.subr.mxu0 %v259
    %1537 = vmatpush1.msra.mxu0 %v258
    %1538 = vmatprep.subr.mxu0 %v262
    %1539 = vmatpush1.msra.mxu0 %v261
    %1540 = vmatprep.subr.mxu0 %v265
    %1541 = vmatpush1.msra.mxu0 %v264
    %1542 = vmatprep.subr.mxu0 %v268
    %1543 = vmatpush1.msra.mxu0 %v267
    %1544 = vmatprep.subr.mxu0 %v271
    %1545 = vmatpush1.msra.mxu0 %v270
    %1546 = vmatprep.subr.mxu0 %v274
    %1547 = vmatpush1.msra.mxu0 %v273
    %1548 = vmatprep.subr.mxu0 %v277
    %1549 = vmatpush1.msra.mxu0 %v276
    %1550 = vmatprep.subr.mxu0 %v280
    %1551 = vmatpush1.msra.mxu0 %v279
    %1552 = vmatprep.subr.mxu0 0.0
    %1553 = vmatpush1.msra.mxu0 0.0
    %1554 = vmatprep.subr.mxu0 0.0
    %1555 = vmatpush1.msra.mxu0 0.0
    %1556 = vmatprep.subr.mxu0 0.0
    %1557 = vmatpush1.msra.mxu0 0.0
    %1558 = vmatprep.subr.mxu0 0.0
    %1559 = vmatpush1.msra.mxu0 0.0
    %1560 = vmatprep.subr.mxu0 0.0
    %1561 = vmatpush1.msra.mxu0 0.0
    %1562 = vmatprep.subr.mxu0 0.0
    %1563 = vmatpush1.msra.mxu0 0.0
    %1564 = vmatprep.subr.mxu0 0.0
    %1565 = vmatpush1.msra.mxu0 0.0
    %1566 = vmatprep.subr.mxu0 0.0
    %1567 = vmatpush1.msra.mxu0 0.0
    %1568 = vmatprep.subr.mxu0 0.0
    %1569 = vmatpush1.msra.mxu0 0.0
    %1570 = vmatprep.subr.mxu0 0.0
    %1571 = vmatpush1.msra.mxu0 0.0
    %1572 = vmatprep.subr.mxu0 0.0
    %1573 = vmatpush1.msra.mxu0 0.0
    %1574 = vmatprep.subr.mxu0 0.0
    %1575 = vmatpush1.msra.mxu0 0.0
    %1576 = vmatprep.subr.mxu0 0.0
    %1577 = vmatpush1.msra.mxu0 0.0
    %1578 = vmatprep.subr.mxu0 0.0
    %1579 = vmatpush1.msra.mxu0 0.0
    %1580 = vmatprep.subr.mxu0 0.0
    %1581 = vmatpush1.msra.mxu0 0.0
    %1582 = vmatprep.subr.mxu0 0.0
    %1583 = vmatpush1.msra.mxu0 0.0
    %1584 = vmatprep.mubr.f32.mxu0 0.0
    %1585 = vmatmul.mubr.f32.gmra.mrb[0].mxu0 %v1518
    %v1586 = vpop.f32.mrb[0].mxu0
    %v1587 = vadd.f32 %v287, %v1586
    %v1588 = vpop.f32.mrb[0].mxu0
    %v1589 = vadd.f32 %v291, %v1588
    %1590 = vdwg.mxu0
    %1591 = vmatprep.subr.mxu0 0.0
    %1592 = vmatpush1.msra.mxu0 %v236
    %1593 = vmatprep.subr.mxu0 0.0
    %1594 = vmatpush1.msra.mxu0 %v239
    %1595 = vmatprep.subr.mxu0 0.0
    %1596 = vmatpush1.msra.mxu0 %v242
    %1597 = vmatprep.subr.mxu0 0.0
    %1598 = vmatpush1.msra.mxu0 %v245
    %1599 = vmatprep.subr.mxu0 0.0
    %1600 = vmatpush1.msra.mxu0 %v248
    %1601 = vmatprep.subr.mxu0 0.0
    %1602 = vmatpush1.msra.mxu0 %v251
    %1603 = vmatprep.subr.mxu0 0.0
    %1604 = vmatpush1.msra.mxu0 %v254
    %1605 = vmatprep.subr.mxu0 0.0
    %1606 = vmatpush1.msra.mxu0 %v257
    %1607 = vmatprep.subr.mxu0 0.0
    %1608 = vmatpush1.msra.mxu0 %v260
    %1609 = vmatprep.subr.mxu0 0.0
    %1610 = vmatpush1.msra.mxu0 %v263
    %1611 = vmatprep.subr.mxu0 0.0
    %1612 = vmatpush1.msra.mxu0 %v266
    %1613 = vmatprep.subr.mxu0 0.0
    %1614 = vmatpush1.msra.mxu0 %v269
    %1615 = vmatprep.subr.mxu0 0.0
    %1616 = vmatpush1.msra.mxu0 %v272
    %1617 = vmatprep.subr.mxu0 0.0
    %1618 = vmatpush1.msra.mxu0 %v275
    %1619 = vmatprep.subr.mxu0 0.0
    %1620 = vmatpush1.msra.mxu0 %v278
    %1621 = vmatprep.subr.mxu0 0.0
    %1622 = vmatpush1.msra.mxu0 %v281
    %1623 = vmatprep.subr.mxu0 0.0
    %1624 = vmatpush1.msra.mxu0 0.0
    %1625 = vmatprep.subr.mxu0 0.0
    %1626 = vmatpush1.msra.mxu0 0.0
    %1627 = vmatprep.subr.mxu0 0.0
    %1628 = vmatpush1.msra.mxu0 0.0
    %1629 = vmatprep.subr.mxu0 0.0
    %1630 = vmatpush1.msra.mxu0 0.0
    %1631 = vmatprep.subr.mxu0 0.0
    %1632 = vmatpush1.msra.mxu0 0.0
    %1633 = vmatprep.subr.mxu0 0.0
    %1634 = vmatpush1.msra.mxu0 0.0
    %1635 = vmatprep.subr.mxu0 0.0
    %1636 = vmatpush1.msra.mxu0 0.0
    %1637 = vmatprep.subr.mxu0 0.0
    %1638 = vmatpush1.msra.mxu0 0.0
    %1639 = vmatprep.subr.mxu0 0.0
    %1640 = vmatpush1.msra.mxu0 0.0
    %1641 = vmatprep.subr.mxu0 0.0
    %1642 = vmatpush1.msra.mxu0 0.0
    %1643 = vmatprep.subr.mxu0 0.0
    %1644 = vmatpush1.msra.mxu0 0.0
    %1645 = vmatprep.subr.mxu0 0.0
    %1646 = vmatpush1.msra.mxu0 0.0
    %1647 = vmatprep.subr.mxu0 0.0
    %1648 = vmatpush1.msra.mxu0 0.0
    %1649 = vmatprep.subr.mxu0 0.0
    %1650 = vmatpush1.msra.mxu0 0.0
    %1651 = vmatprep.subr.mxu0 0.0
    %1652 = vmatpush1.msra.mxu0 0.0
    %1653 = vmatprep.subr.mxu0 0.0
    %1654 = vmatpush1.msra.mxu0 0.0
    %1655 = vmatprep.mubr.f32.mxu0 0.0
    %1656 = vmatmul.mubr.f32.gmra.mrb[0].mxu0 %v1518
    %v1657 = vpop.f32.mrb[0].mxu0
    %v1658 = vadd.f32 %v295, %v1657
    %v1659 = vpop.f32.mrb[0].mxu0
    %1660 = vdwg.mxu0
    %v1661 = vadd.f32 %v149, %v1587
    %v1662 = vxor.u32 %v1661, 2147483648
    %v1663 = vmul.f32 %v1662, 1.442695
    %v1664 = vpow.pop %v1663
    %v1665 = vadd.f32 %v1664, 1.0
    %v1666 = vrcp.pop %v1665
    %v1667 = vmul.f32 1.0, %v1666
    %v1668 = vadd.f32 %v151, %v1589
    %v1669 = vxor.u32 %v1668, 2147483648
    %v1670 = vmul.f32 %v1669, 1.442695
    %v1671 = vpow.pop %v1670
    %v1672 = vadd.f32 %v1671, 1.0
    %v1673 = vrcp.pop %v1672
    %v1674 = vmul.f32 1.0, %v1673
    %v1675 = vmul.f32 %v1667, %v1658
    %v1676 = vadd.f32 %v226, %v1675
    %v1677 = vtanh.pop %v1676
    %v1678 = vsub.f32 1.0, %v1674
    %v1679 = vmul.f32 %v1678, %v1677
    %v1680 = vmul.f32 %v1674, %v1518
    %v1681 = vadd.f32 %v1679, %v1680
    %v1682 = vld [vmem:[%s6] sm:$0xff]
    %v1683 = vld [vmem:[%s6 + $0x8] sm:$0xff]
    %v1684 = vld [vmem:[%s6 + $0x10] sm:$0xff]
    %v1685 = vld [vmem:[%s6 + $0x18] sm:$0xff]
    %v1686 = vld [vmem:[%s6 + $0x20] sm:$0xff]
    %v1687 = vld [vmem:[%s6 + $0x28] sm:$0xff]
    %v1688 = vld [vmem:[%s6 + $0x30] sm:$0xff]
    %v1689 = vld [vmem:[%s6 + $0x38] sm:$0xff]
    %v1690 = vld [vmem:[%s6 + $0x40] sm:$0xff]
    %v1691 = vld [vmem:[%s6 + $0x48] sm:$0xff]
    %v1692 = vld [vmem:[%s6 + $0x50] sm:$0xff]
    %v1693 = vld [vmem:[%s6 + $0x58] sm:$0xff]
    %v1694 = vld [vmem:[%s6 + $0x60] sm:$0xff]
    %v1695 = vld [vmem:[%s6 + $0x68] sm:$0xff]
    %v1696 = vld [vmem:[%s6 + $0x70] sm:$0xff]
    %v1697 = vld [vmem:[%s6 + $0x78] sm:$0xff]
    %v1698 = vld [vmem:[%s7] sm:$0x1]
    %v1700 = vlaneseq
    %v1701 = vshrl.u32 %v1700, 7
    %v1702 = vsub.s32 0, %v1701
    %v1703 = vrot.slane %v1698, %v1702
    %1705 = vmatprep.subr.mxu0 0.0
    %1706 = vmatpush1.msra.mxu0 %v1682
    %1707 = vmatprep.subr.mxu0 0.0
    %1708 = vmatpush1.msra.mxu0 %v1683
    %1709 = vmatprep.subr.mxu0 0.0
    %1710 = vmatpush1.msra.mxu0 %v1684
    %1711 = vmatprep.subr.mxu0 0.0
    %1712 = vmatpush1.msra.mxu0 %v1685
    %1713 = vmatprep.subr.mxu0 0.0
    %1714 = vmatpush1.msra.mxu0 %v1686
    %1715 = vmatprep.subr.mxu0 0.0
    %1716 = vmatpush1.msra.mxu0 %v1687
    %1717 = vmatprep.subr.mxu0 0.0
    %1718 = vmatpush1.msra.mxu0 %v1688
    %1719 = vmatprep.subr.mxu0 0.0
    %1720 = vmatpush1.msra.mxu0 %v1689
    %1721 = vmatprep.subr.mxu0 0.0
    %1722 = vmatpush1.msra.mxu0 %v1690
    %1723 = vmatprep.subr.mxu0 0.0
    %1724 = vmatpush1.msra.mxu0 %v1691
    %1725 = vmatprep.subr.mxu0 0.0
    %1726 = vmatpush1.msra.mxu0 %v1692
    %1727 = vmatprep.subr.mxu0 0.0
    %1728 = vmatpush1.msra.mxu0 %v1693
    %1729 = vmatprep.subr.mxu0 0.0
    %1730 = vmatpush1.msra.mxu0 %v1694
    %1731 = vmatprep.subr.mxu0 0.0
    %1732 = vmatpush1.msra.mxu0 %v1695
    %1733 = vmatprep.subr.mxu0 0.0
    %1734 = vmatpush1.msra.mxu0 %v1696
    %1735 = vmatprep.subr.mxu0 0.0
    %1736 = vmatpush1.msra.mxu0 %v1697
    %1737 = vmatprep.subr.mxu0 0.0
    %1738 = vmatpush1.msra.mxu0 0.0
    %1739 = vmatprep.subr.mxu0 0.0
    %1740 = vmatpush1.msra.mxu0 0.0
    %1741 = vmatprep.subr.mxu0 0.0
    %1742 = vmatpush1.msra.mxu0 0.0
    %1743 = vmatprep.subr.mxu0 0.0
    %1744 = vmatpush1.msra.mxu0 0.0
    %1745 = vmatprep.subr.mxu0 0.0
    %1746 = vmatpush1.msra.mxu0 0.0
    %1747 = vmatprep.subr.mxu0 0.0
    %1748 = vmatpush1.msra.mxu0 0.0
    %1749 = vmatprep.subr.mxu0 0.0
    %1750 = vmatpush1.msra.mxu0 0.0
    %1751 = vmatprep.subr.mxu0 0.0
    %1752 = vmatpush1.msra.mxu0 0.0
    %1753 = vmatprep.subr.mxu0 0.0
    %1754 = vmatpush1.msra.mxu0 0.0
    %1755 = vmatprep.subr.mxu0 0.0
    %1756 = vmatpush1.msra.mxu0 0.0
    %1757 = vmatprep.subr.mxu0 0.0
    %1758 = vmatpush1.msra.mxu0 0.0
    %1759 = vmatprep.subr.mxu0 0.0
    %1760 = vmatpush1.msra.mxu0 0.0
    %1761 = vmatprep.subr.mxu0 0.0
    %1762 = vmatpush1.msra.mxu0 0.0
    %1763 = vmatprep.subr.mxu0 0.0
    %1764 = vmatpush1.msra.mxu0 0.0
    %1765 = vmatprep.subr.mxu0 0.0
    %1766 = vmatpush1.msra.mxu0 0.0
    %1767 = vmatprep.subr.mxu0 0.0
    %1768 = vmatpush1.msra.mxu0 0.0
    %1769 = vmatprep.mubr.f32.mxu0 0.0
    %1770 = vmatmul.mubr.f32.gmra.mrb[0].mxu0 %v1681
    %v1771 = vpop.f32.mrb[0].mxu0
    %v1772 = vadd.f32 %v1703, %v1771
    %v1773 = vpop.f32.mrb[0].mxu0
    %1774 = vdwg.mxu0
    %vm1775 = vcmask 328704
    %v1776 = vsel %vm1775, %v1772, -inf
    %1777 = vmax.xlane.f32.xlu0 %v1776
    %v1778 = vpop.xlane.xlu0 %1777
    %v1779 = vsub.f32 %v1772, %v1778
    %v1780 = vmul.f32 %v1779, 1.442695
    %v1781 = vpow.pop %v1780
    %v1782 = vsel %vm1775, %v1781, 0.0
    %1783 = vadd.xlane.f32.xlu0 %v1782
    %v1784 = vpop.xlane.xlu0 %1783
    %v1785 = vlog2.pop %v1784
    %v1786 = vmul.f32 %v1785, 0.6931472
    %v1787 = vsub.f32 %v1779, %v1786
    %1788 = vst.msk [vmem:[#allocation5] sm:$0x3] %vm1775, %v1787
    // Predicated region
    $region38: #{tpu_custom_call.1} parent=1 // pred_check
      _
    $region39: #{tpu_custom_call.1} parent=1 // pred_check_branch
      %1790 = sbr.rel (0) target = $region41
    $region40: #{tpu_custom_call.1} parent=1 // pred_region
      %s1792 = ssub.s32 32, 32
      %1793 = vsyncadd [#allocation4], %s1792
      %s1795 = sshll.u32 [#allocation5], 4
      %s1796 = int_to_ptr.vmem [resolvable:$true] %s1795
      %1798 = dma.vmem_to_hbm [thread:$0]  %s1796, 32, %s8, [#allocation4]
    $region41: #{tpu_custom_call.1} parent=1 // pred_fallthru
      _
    // Predicated region
    $region42: #{tpu_custom_call.1} parent=1 // pred_check
      _
    $region43: #{tpu_custom_call.1} parent=1 // pred_check_branch
      %1800 = sbr.rel (0) target = $region45
    $region44: #{tpu_custom_call.1} parent=1 // pred_region
      %1801 = dma.done [#allocation4], 32
    $region45: #{tpu_custom_call.1} parent=1 // pred_fallthru
      _
    %1802 = vsyncpa [#allocation3], 1
    %1803 = vsyncpa [#allocation4], 1

</llo_original>
